<compile_context>
chip_gen: v5e
topology: v5e:2x2
jax: 0.10.0
libtpu: 0.0.40
codegen_flags: <defaults>
</compile_context>

<pallas_src>
import jax
import jax.numpy as jnp
from jax import lax
from jax.experimental import pallas as pl
from jax.experimental.pallas import tpu as pltpu

K = 7               # conv kernel size
P = (K - 1) // 2    # padding = 3
LANE = 128


def _round_up(n, m):
    return ((n + m - 1) // m) * m


def _largest_divisor_leq(n, cap):
    for d in range(min(n, cap), 0, -1):
        if n % d == 0:
            return d
    return 1


def spatial_gate(x, conv_w, bn_gamma, bn_beta, bn_mean, bn_var, eps=1e-5):
    """x: (B, C, H, W). conv_w: (1, 2, 7, 7). BN params: shape (1,)."""
    B, C, H, W = x.shape
    HW = H * W
    dtype = x.dtype
    itemsize = jnp.dtype(dtype).itemsize

    # Lane-dense presentation: last dim H*W maps onto the 128-lane axis.
    x_flat = x.reshape(B, C, HW)

    # Fold inference-mode BN into an affine on the conv output.
    a = bn_gamma / jnp.sqrt(bn_var + eps)                  # (1,)
    b = bn_beta - bn_mean * a                              # (1,)
    ab = jnp.concatenate([a, b]).astype(jnp.float32)       # (2,)

    # Packed conv weights for the sublane-stacked conv:
    #   w_pack[r, c*K + dw] = conv_w[0, c, r, dw]  (r = dh),  row 7 = 0.
    w = conv_w.reshape(2, K, K).astype(jnp.float32)
    w_pack = jnp.zeros((8, 2 * K), jnp.float32)
    w_pack = w_pack.at[:K, :K].set(w[0]).at[:K, K:].set(w[1])

    # Column-validity masks (one per dw), built host-side:
    #   mask[dw, f] = 1 iff 0 <= (f % W) + dw - P < W.
    col = jnp.arange(HW, dtype=jnp.int32) % W
    dw_idx = jnp.arange(K, dtype=jnp.int32)[:, None]
    colmask = ((col[None, :] >= (P - dw_idx)) &
               (col[None, :] < (W + P - dw_idx))).astype(jnp.float32)   # (K, HW)

    # Flat padded-row geometry: pooled plane sits at [LPAD, LPAD+HW) of a row of
    # length L with zero halos; a shift by (dh-P)*W + (dw-P) never wraps.
    halo = P * W + P
    LPAD = _round_up(max(halo, 1), LANE)                   # 128-aligned halo
    L = LPAD + HW + LPAD

    # Channel-chunk size: match dtype sublane packing (8 f32 / 16 bf16 / 32 i8)
    # times 4 so each chunk is a few fully packed vregs.  Must divide C.
    base = 8 * max(1, 4 // itemsize)
    CB = _largest_divisor_leq(C, min(C, 4 * base))
    nC = C // CB
    # TODO(synk): prime C > 4*base falls back to CB == 1 (correct but slow);
    #             handle a ragged last chunk instead of requiring a divisor.

    def kernel(ab_ref, w_ref, mask_ref, x_hbm, o_hbm,
               xblk, ostg, stk, sem_in, sem_out):
        bi = pl.program_id(0)

        # ---------------- DMA helpers (slot / sem indices are always static) --
        def fetch(ci, slot):
            pltpu.make_async_copy(
                x_hbm.at[bi, pl.ds(ci * CB, CB)],
                xblk.at[pl.ds(ci * CB, CB)],
                sem_in.at[slot]).start()

        def wait_in(ci, slot):
            pltpu.make_async_copy(
                x_hbm.at[bi, pl.ds(ci * CB, CB)],
                xblk.at[pl.ds(ci * CB, CB)],
                sem_in.at[slot]).wait()

        def out_start(ci, slot):
            pltpu.make_async_copy(
                ostg.at[slot],
                o_hbm.at[bi, pl.ds(ci * CB, CB)],
                sem_out.at[slot]).start()

        def out_wait(ci, slot):
            pltpu.make_async_copy(
                ostg.at[slot],
                o_hbm.at[bi, pl.ds(ci * CB, CB)],
                sem_out.at[slot]).wait()

        # Prime the depth-2 input stream.
        fetch(0, 0)
        if nC > 1:
            fetch(1, 1)

        # ---- phase 1: streamed channel max / mean (overlaps the x DMA) -------
        # Running (CB, HW) elementwise accumulators; one cross-sublane reduce at
        # the end (keeps the XLU free for the conv rolls).
        def pool_pair(p, carry):
            rmax_c, rsum_c = carry
            for s in range(2):                      # static slot index
                ci = 2 * p + s
                wait_in(ci, s)

                @pl.when(ci + 2 < nC)
                def _():
                    fetch(ci + 2, s)

                start = pl.multiple_of(ci * CB, CB)
                xb = xblk[pl.ds(start, CB), :].astype(jnp.float32)
                rmax_c = jnp.maximum(rmax_c, xb)
                rsum_c = rsum_c + xb
            return rmax_c, rsum_c

        rmax_cb = jnp.full((CB, HW), -jnp.inf, jnp.float32)
        rsum_cb = jnp.zeros((CB, HW), jnp.float32)
        npairs = nC // 2
        if npairs > 0:
            rmax_cb, rsum_cb = lax.fori_loop(
                0, npairs, pool_pair, (rmax_cb, rsum_cb), unroll=2)
        if nC % 2 == 1:                             # static tail chunk
            ci = nC - 1
            wait_in(ci, ci & 1)
            xb = xblk[pl.ds(ci * CB, CB), :].astype(jnp.float32)
            rmax_cb = jnp.maximum(rmax_cb, xb)
            rsum_cb = rsum_cb + xb

        rmax = jnp.max(rmax_cb, axis=0, keepdims=True)          # (1, HW)
        pmean = jnp.sum(rsum_cb, axis=0, keepdims=True) * (1.0 / C)

        # ---- phase 2: dh-shifted (8, L) stack per pooled plane ----------------
        # Row r of plane c = roll(padded_plane_c, (P - r) * W); row 7 is zero.
        # Only the halo strips + zero rows are cleared (interior is overwritten).
        for c, plane in ((0, rmax), (1, pmean)):
            brow = c * 8 + P                                     # unshifted row
            stk[pl.ds(brow, 1), pl.ds(0, LPAD)] = jnp.zeros((1, LPAD), jnp.float32)
            stk[pl.ds(brow, 1), pl.ds(LPAD + HW, LPAD)] = jnp.zeros((1, LPAD), jnp.float32)
            stk[pl.ds(brow, 1), pl.ds(LPAD, HW)] = plane
            stk[pl.ds(c * 8 + K, 1), :] = jnp.zeros((1, L), jnp.float32)
            base_row = stk[pl.ds(brow, 1), :]                    # (1, L)
            for r in range(K):
                if r == P:
                    continue
                sh = ((P - r) * W) % L
                stk[pl.ds(c * 8 + r, 1), :] = pltpu.roll(base_row, shift=sh, axis=1)

        # ---- phase 3: 7x7 conv = 7 column rolls + packed FMAs + 1 reduce ------
        # TODO(synk): for very large H*W (>~8K lanes) tile this phase over HW
        #             chunks; the (8, L) stacks exceed the 64x4KiB vreg file.
        stack0 = stk[pl.ds(0, 8), :]                             # (8, L)
        stack1 = stk[pl.ds(8, 8), :]                             # (8, L)
        acc = jnp.zeros((8, HW), jnp.float32)
        for dw in range(K):
            shc = (P - dw) % L
            r0 = stack0 if shc == 0 else pltpu.roll(stack0, shift=shc, axis=1)
            r1 = stack1 if shc == 0 else pltpu.roll(stack1, shift=shc, axis=1)
            w0 = w_ref[:, pl.ds(dw, 1)]                          # (8, 1) plane-0
            w1 = w_ref[:, pl.ds(K + dw, 1)]                      # (8, 1) plane-1
            contrib = (r0[:, LPAD:LPAD + HW] * w0 +
                       r1[:, LPAD:LPAD + HW] * w1)               # (8, HW)
            acc = acc + mask_ref[pl.ds(dw, 1), :] * contrib      # kill col bleed
        y = jnp.sum(acc, axis=0, keepdims=True)                  # (1, HW), 1 XLU reduce

        # ---- phase 4: folded BN + sigmoid gate, streamed gated multiply -------
        y = y * ab_ref[0] + ab_ref[1]
        # Note: gate is cast to x's dtype before the multiply (exact for f32; a
        # tiny extra quantization of sigmoid(y) for bf16 inputs vs. the ref).
        gate = jax.nn.sigmoid(y).astype(dtype)                   # (1, HW)
        gate_cb = jnp.broadcast_to(gate, (CB, HW))               # hoisted broadcast

        def out_pair(p, carry):
            for s in range(2):                      # static staging slot / sem
                ci = 2 * p + s

                @pl.when(ci >= 2)                   # slot reuse: drain chunk ci-2
                def _():
                    out_wait(ci - 2, s)

                start = pl.multiple_of(ci * CB, CB)
                ostg[s] = (xblk[pl.ds(start, CB), :] * gate_cb).astype(dtype)
                out_start(ci, s)
            return carry

        if npairs > 0:
            lax.fori_loop(0, npairs, out_pair, 0, unroll=2)
        if nC % 2 == 1:                             # static tail chunk
            ci = nC - 1
            s = ci & 1
            if ci >= 2:
                out_wait(ci - 2, s)
            ostg[s] = (xblk[pl.ds(ci * CB, CB), :] * gate_cb).astype(dtype)
            out_start(ci, s)

        # Drain the last (<=2) in-flight output copies before the step ends.
        for t in range(min(2, nC)):
            cl = nC - 1 - t
            out_wait(cl, cl & 1)

    # VMEM budget: resident x block (single-buffered) + output staging + conv
    # scratch + (double-buffered) small blocked inputs + headroom.  Cap at 80%
    # of the part's physical VMEM (v5e/v6e 128 MiB, v7x 64 MiB).
    needed = (C * HW * itemsize
              + 2 * CB * HW * itemsize
              + 16 * L * 4
              + 2 * (K * HW * 4 + 8 * 2 * K * 4)
              + (4 << 20))
    try:
        cap = int(pltpu.get_tpu_info().vmem_capacity_bytes * 0.8)
    except Exception:
        cap = 100 << 20
    vmem_limit = int(min(cap, max(8 << 20, needed)))

    # TODO(synk): when B == 1 on v7x (2 TensorCores), add a second "parallel"
    #             grid axis over C-halves of the multiply phase so both cores
    #             get work; grid=(1,) leaves one core idle.

    out_flat = pl.pallas_call(
        kernel,
        out_shape=jax.ShapeDtypeStruct((B, C, HW), dtype),
        grid=(B,),
        in_specs=[
            pl.BlockSpec(memory_space=pltpu.MemorySpace.SMEM),   # folded BN affine (2,)
            pl.BlockSpec((8, 2 * K), lambda i: (0, 0)),          # packed conv weights
            pl.BlockSpec((K, HW), lambda i: (0, 0)),             # per-dw column masks
            pl.BlockSpec(memory_space=pl.ANY),                   # x stays in HBM
        ],
        out_specs=pl.BlockSpec(memory_space=pl.ANY),             # out written via DMA
        scratch_shapes=[
            pltpu.VMEM((C, HW), dtype),                          # resident x block
            pltpu.VMEM((2, CB, HW), dtype),                      # output staging (2 slots)
            pltpu.VMEM((16, L), jnp.float32),                    # dh-shifted conv stacks
            pltpu.SemaphoreType.DMA((2,)),                       # input-stream sems
            pltpu.SemaphoreType.DMA((2,)),                       # output-stream sems
        ],
        compiler_params=pltpu.CompilerParams(
            dimension_semantics=("parallel",),
            vmem_limit_bytes=vmem_limit,
            has_side_effects=True,
        ),
    )(ab, w_pack, colmask, x_flat)

    return out_flat.reshape(B, C, H, W)


def spatial_gate_reference(x, conv_w, bn_gamma, bn_beta, bn_mean, bn_var, eps=1e-5):
    """Pure-JAX reference (NCHW) for correctness checking."""
    cmax = jnp.max(x, axis=1, keepdims=True)
    cmean = jnp.mean(x, axis=1, keepdims=True)
    pooled = jnp.concatenate([cmax, cmean], axis=1)              # (B, 2, H, W)
    y = lax.conv_general_dilated(
        pooled, conv_w, window_strides=(1, 1), padding=((P, P), (P, P)),
        dimension_numbers=("NCHW", "OIHW", "NCHW"))
    a = bn_gamma / jnp.sqrt(bn_var + eps)
    b = bn_beta - bn_mean * a
    y = y * a[None, :, None, None] + b[None, :, None, None]
    return x * jax.nn.sigmoid(y)


if __name__ == "__main__":
    key = jax.random.PRNGKey(0)
    kx, kw, kg, kb, km, kv, kx2 = jax.random.split(key, 7)

    # Deterministic synthetic parameters (nn.Conv2d(2,1,7,bias=False) + BatchNorm2d(1)).
    conv_w = jax.random.normal(kw, (1, 2, K, K), dtype=jnp.float32) * 0.1
    bn_gamma = 1.0 + 0.1 * jax.random.normal(kg, (1,), dtype=jnp.float32)
    bn_beta = 0.1 * jax.random.normal(kb, (1,), dtype=jnp.float32)
    bn_mean = 0.1 * jax.random.normal(km, (1,), dtype=jnp.float32)
    bn_var = jnp.abs(1.0 + 0.1 * jax.random.normal(kv, (1,), dtype=jnp.float32))
    params = (conv_w, bn_gamma, bn_beta, bn_mean, bn_var)

    # Small-shape check (matches the module's typical toy usage).
    B, C, H, W = 2, 4, 16, 16
    x = jax.random.normal(kx, (B, C, H, W), dtype=jnp.float32)
    out = jax.block_until_ready(spatial_gate(x, *params))
    ref = spatial_gate_reference(x, *params)
    assert out.shape == (B, C, H, W)
    assert jnp.allclose(out, ref, atol=1e-4, rtol=1e-4), "mismatch vs reference (small)"

    # Second check exercising the multi-chunk streamed DMA path (nC > 2) and B == 1.
    x2 = jax.random.normal(kx2, (1, 96, 16, 16), dtype=jnp.float32)
    out2 = jax.block_until_ready(spatial_gate(x2, *params))
    ref2 = spatial_gate_reference(x2, *params)
    assert jnp.allclose(out2, ref2, atol=1e-4, rtol=1e-4), "mismatch vs reference (streamed)"

    print("KERNEL_OK")
</pallas_src>

<mosaic_0001>
module attributes {stable_mosaic.version = 11 : i64} {
  func.func @kernel(%arg0: i32, %arg1: memref<2xf32, #tpu.memory_space<smem>>, %arg2: memref<8x14xf32, #tpu.memory_space<vmem>>, %arg3: memref<7x256xf32, #tpu.memory_space<vmem>>, %arg4: memref<2x4x256xf32, #tpu.memory_space<any>>, %arg5: memref<2x4x256xf32, #tpu.memory_space<any>>, %arg6: memref<4x256xf32, #tpu.memory_space<vmem>>, %arg7: memref<2x4x256xf32, #tpu.memory_space<vmem>>, %arg8: memref<16x512xf32, #tpu.memory_space<vmem>>, %arg9: memref<2x!tpu.dma_semaphore, #tpu.memory_space<semaphore_mem>>, %arg10: memref<2x!tpu.dma_semaphore, #tpu.memory_space<semaphore_mem>>) attributes {dimension_semantics = [#tpu.dimension_semantics<parallel>], iteration_bounds = array<i64: 2>, scalar_prefetch = 0 : i64, scratch_operands = 5 : i64, tpu.core_type = #tpu.core_type<tc>, window_params = [{transform_indices = @transform_0, window_bounds = array<i64: 2>}, {pipeline_mode = #tpu.pipeline_mode<synchronous>, transform_indices = @transform_1, window_bounds = array<i64: 8, 14>}, {pipeline_mode = #tpu.pipeline_mode<synchronous>, transform_indices = @transform_2, window_bounds = array<i64: 7, 256>}, {}, {}]} {
    %c0_i32 = arith.constant 0 : i32
    %c0_i32_0 = arith.constant 0 : i32
    %c0_i32_1 = arith.constant 0 : i32
    %0 = tpu.memref_slice %arg4[%arg0, %c0_i32_0, %c0_i32_1] : memref<2x4x256xf32, #tpu.memory_space<any>> -> memref<1x4x256xf32, #tpu.memory_space<any>>
    %1 = tpu.memref_squeeze %0 : memref<1x4x256xf32, #tpu.memory_space<any>> -> memref<4x256xf32, #tpu.memory_space<any>>
    %c0_i32_2 = arith.constant 0 : i32
    %c0_i32_3 = arith.constant 0 : i32
    %2 = tpu.memref_slice %arg6[%c0_i32_2, %c0_i32_3] : memref<4x256xf32, #tpu.memory_space<vmem>> -> memref<4x256xf32, #tpu.memory_space<vmem>>
    %3 = tpu.memref_slice %arg9[%c0_i32] : memref<2x!tpu.dma_semaphore, #tpu.memory_space<semaphore_mem>> -> memref<1x!tpu.dma_semaphore, #tpu.memory_space<semaphore_mem>>
    %4 = tpu.memref_squeeze %3 : memref<1x!tpu.dma_semaphore, #tpu.memory_space<semaphore_mem>> -> memref<!tpu.dma_semaphore, #tpu.memory_space<semaphore_mem>>
    tpu.enqueue_dma source(%1 : memref<4x256xf32, #tpu.memory_space<any>>) target(%2 : memref<4x256xf32, #tpu.memory_space<vmem>>) target_semaphore(%4 : memref<!tpu.dma_semaphore, #tpu.memory_space<semaphore_mem>>)
    %cst = arith.constant 0xFF800000 : f32
    %5 = vector.broadcast %cst : f32 to vector<4x256xf32>
    %cst_4 = arith.constant 0.000000e+00 : f32
    %6 = vector.broadcast %cst_4 : f32 to vector<4x256xf32>
    %c0_i32_5 = arith.constant 0 : i32
    %c0_i32_6 = arith.constant 0 : i32
    %c0_i32_7 = arith.constant 0 : i32
    %7 = tpu.memref_slice %arg4[%arg0, %c0_i32_6, %c0_i32_7] : memref<2x4x256xf32, #tpu.memory_space<any>> -> memref<1x4x256xf32, #tpu.memory_space<any>>
    %8 = tpu.memref_squeeze %7 : memref<1x4x256xf32, #tpu.memory_space<any>> -> memref<4x256xf32, #tpu.memory_space<any>>
    %c0_i32_8 = arith.constant 0 : i32
    %c0_i32_9 = arith.constant 0 : i32
    %9 = tpu.memref_slice %arg6[%c0_i32_8, %c0_i32_9] : memref<4x256xf32, #tpu.memory_space<vmem>> -> memref<4x256xf32, #tpu.memory_space<vmem>>
    %10 = tpu.memref_slice %arg9[%c0_i32_5] : memref<2x!tpu.dma_semaphore, #tpu.memory_space<semaphore_mem>> -> memref<1x!tpu.dma_semaphore, #tpu.memory_space<semaphore_mem>>
    %11 = tpu.memref_squeeze %10 : memref<1x!tpu.dma_semaphore, #tpu.memory_space<semaphore_mem>> -> memref<!tpu.dma_semaphore, #tpu.memory_space<semaphore_mem>>
    tpu.wait_dma2 semaphore(%11 : memref<!tpu.dma_semaphore, #tpu.memory_space<semaphore_mem>>) src(%8 : memref<4x256xf32, #tpu.memory_space<any>>) dst(%9 : memref<4x256xf32, #tpu.memory_space<vmem>>)
    %c0 = arith.constant 0 : index
    %c0_10 = arith.constant 0 : index
    %12 = vector.load %arg6[%c0, %c0_10] : memref<4x256xf32, #tpu.memory_space<vmem>>, vector<4x256xf32>
    %13 = arith.maximumf %5, %12 : vector<4x256xf32>
    %14 = arith.addf %6, %12 : vector<4x256xf32>
    %cst_11 = arith.constant dense<0xFF800000> : vector<256xf32>
    %15 = vector.multi_reduction <maximumf>, %13, %cst_11 [0] : vector<4x256xf32> to vector<256xf32>
    %16 = vector.shape_cast %15 : vector<256xf32> to vector<1x256xf32>
    %cst_12 = arith.constant dense<0.000000e+00> : vector<256xf32>
    %17 = vector.multi_reduction <add>, %14, %cst_12 [0] : vector<4x256xf32> to vector<256xf32>
    %18 = vector.shape_cast %17 : vector<256xf32> to vector<1x256xf32>
    %cst_13 = arith.constant 2.500000e-01 : f32
    %19 = vector.broadcast %cst_13 : f32 to vector<1x256xf32>
    %20 = arith.mulf %18, %19 : vector<1x256xf32>
    %cst_14 = arith.constant 0.000000e+00 : f32
    %21 = vector.broadcast %cst_14 : f32 to vector<1x128xf32>
    %c3 = arith.constant 3 : index
    %c0_15 = arith.constant 0 : index
    %22 = vector.load %arg8[%c3, %c0_15] : memref<16x512xf32, #tpu.memory_space<vmem>>, vector<1x128xf32>
    tpu.vector_store %arg8[%c3, %c0_15], %21 {strides = array<i32>} : memref<16x512xf32, #tpu.memory_space<vmem>>, vector<1x128xf32>,
    %cst_16 = arith.constant 0.000000e+00 : f32
    %23 = vector.broadcast %cst_16 : f32 to vector<1x128xf32>
    %c3_17 = arith.constant 3 : index
    %c384 = arith.constant 384 : index
    %24 = vector.load %arg8[%c3_17, %c384] : memref<16x512xf32, #tpu.memory_space<vmem>>, vector<1x128xf32>
    tpu.vector_store %arg8[%c3_17, %c384], %23 {strides = array<i32>} : memref<16x512xf32, #tpu.memory_space<vmem>>, vector<1x128xf32>,
    %c3_18 = arith.constant 3 : index
    %c128 = arith.constant 128 : index
    %25 = vector.load %arg8[%c3_18, %c128] : memref<16x512xf32, #tpu.memory_space<vmem>>, vector<1x256xf32>
    tpu.vector_store %arg8[%c3_18, %c128], %16 {strides = array<i32>} : memref<16x512xf32, #tpu.memory_space<vmem>>, vector<1x256xf32>,
    %cst_19 = arith.constant 0.000000e+00 : f32
    %26 = vector.broadcast %cst_19 : f32 to vector<1x512xf32>
    %c7 = arith.constant 7 : index
    %c0_20 = arith.constant 0 : index
    %27 = vector.load %arg8[%c7, %c0_20] : memref<16x512xf32, #tpu.memory_space<vmem>>, vector<1x512xf32>
    tpu.vector_store %arg8[%c7, %c0_20], %26 {strides = array<i32>} : memref<16x512xf32, #tpu.memory_space<vmem>>, vector<1x512xf32>,
    %c3_21 = arith.constant 3 : index
    %c0_22 = arith.constant 0 : index
    %28 = vector.load %arg8[%c3_21, %c0_22] : memref<16x512xf32, #tpu.memory_space<vmem>>, vector<1x512xf32>
    %c48_i32 = arith.constant 48 : i32
    %29 = tpu.dynamic_rotate %28 by %c48_i32 dim 1 : vector<1x512xf32>, i32 -> vector<1x512xf32>
    %c0_23 = arith.constant 0 : index
    %c0_24 = arith.constant 0 : index
    %30 = vector.load %arg8[%c0_23, %c0_24] : memref<16x512xf32, #tpu.memory_space<vmem>>, vector<1x512xf32>
    tpu.vector_store %arg8[%c0_23, %c0_24], %29 {strides = array<i32>} : memref<16x512xf32, #tpu.memory_space<vmem>>, vector<1x512xf32>,
    %c32_i32 = arith.constant 32 : i32
    %31 = tpu.dynamic_rotate %28 by %c32_i32 dim 1 : vector<1x512xf32>, i32 -> vector<1x512xf32>
    %c1 = arith.constant 1 : index
    %c0_25 = arith.constant 0 : index
    %32 = vector.load %arg8[%c1, %c0_25] : memref<16x512xf32, #tpu.memory_space<vmem>>, vector<1x512xf32>
    tpu.vector_store %arg8[%c1, %c0_25], %31 {strides = array<i32>} : memref<16x512xf32, #tpu.memory_space<vmem>>, vector<1x512xf32>,
    %c16_i32 = arith.constant 16 : i32
    %33 = tpu.dynamic_rotate %28 by %c16_i32 dim 1 : vector<1x512xf32>, i32 -> vector<1x512xf32>
    %c2 = arith.constant 2 : index
    %c0_26 = arith.constant 0 : index
    %34 = vector.load %arg8[%c2, %c0_26] : memref<16x512xf32, #tpu.memory_space<vmem>>, vector<1x512xf32>
    tpu.vector_store %arg8[%c2, %c0_26], %33 {strides = array<i32>} : memref<16x512xf32, #tpu.memory_space<vmem>>, vector<1x512xf32>,
    %c496_i32 = arith.constant 496 : i32
    %35 = tpu.dynamic_rotate %28 by %c496_i32 dim 1 : vector<1x512xf32>, i32 -> vector<1x512xf32>
    %c4 = arith.constant 4 : index
    %c0_27 = arith.constant 0 : index
    %36 = vector.load %arg8[%c4, %c0_27] : memref<16x512xf32, #tpu.memory_space<vmem>>, vector<1x512xf32>
    tpu.vector_store %arg8[%c4, %c0_27], %35 {strides = array<i32>} : memref<16x512xf32, #tpu.memory_space<vmem>>, vector<1x512xf32>,
    %c480_i32 = arith.constant 480 : i32
    %37 = tpu.dynamic_rotate %28 by %c480_i32 dim 1 : vector<1x512xf32>, i32 -> vector<1x512xf32>
    %c5 = arith.constant 5 : index
    %c0_28 = arith.constant 0 : index
    %38 = vector.load %arg8[%c5, %c0_28] : memref<16x512xf32, #tpu.memory_space<vmem>>, vector<1x512xf32>
    tpu.vector_store %arg8[%c5, %c0_28], %37 {strides = array<i32>} : memref<16x512xf32, #tpu.memory_space<vmem>>, vector<1x512xf32>,
    %c464_i32 = arith.constant 464 : i32
    %39 = tpu.dynamic_rotate %28 by %c464_i32 dim 1 : vector<1x512xf32>, i32 -> vector<1x512xf32>
    %c6 = arith.constant 6 : index
    %c0_29 = arith.constant 0 : index
    %40 = vector.load %arg8[%c6, %c0_29] : memref<16x512xf32, #tpu.memory_space<vmem>>, vector<1x512xf32>
    tpu.vector_store %arg8[%c6, %c0_29], %39 {strides = array<i32>} : memref<16x512xf32, #tpu.memory_space<vmem>>, vector<1x512xf32>,
    %cst_30 = arith.constant 0.000000e+00 : f32
    %41 = vector.broadcast %cst_30 : f32 to vector<1x128xf32>
    %c11 = arith.constant 11 : index
    %c0_31 = arith.constant 0 : index
    %42 = vector.load %arg8[%c11, %c0_31] : memref<16x512xf32, #tpu.memory_space<vmem>>, vector<1x128xf32>
    tpu.vector_store %arg8[%c11, %c0_31], %41 {strides = array<i32>} : memref<16x512xf32, #tpu.memory_space<vmem>>, vector<1x128xf32>,
    %cst_32 = arith.constant 0.000000e+00 : f32
    %43 = vector.broadcast %cst_32 : f32 to vector<1x128xf32>
    %c11_33 = arith.constant 11 : index
    %c384_34 = arith.constant 384 : index
    %44 = vector.load %arg8[%c11_33, %c384_34] : memref<16x512xf32, #tpu.memory_space<vmem>>, vector<1x128xf32>
    tpu.vector_store %arg8[%c11_33, %c384_34], %43 {strides = array<i32>} : memref<16x512xf32, #tpu.memory_space<vmem>>, vector<1x128xf32>,
    %c11_35 = arith.constant 11 : index
    %c128_36 = arith.constant 128 : index
    %45 = vector.load %arg8[%c11_35, %c128_36] : memref<16x512xf32, #tpu.memory_space<vmem>>, vector<1x256xf32>
    tpu.vector_store %arg8[%c11_35, %c128_36], %20 {strides = array<i32>} : memref<16x512xf32, #tpu.memory_space<vmem>>, vector<1x256xf32>,
    %cst_37 = arith.constant 0.000000e+00 : f32
    %46 = vector.broadcast %cst_37 : f32 to vector<1x512xf32>
    %c15 = arith.constant 15 : index
    %c0_38 = arith.constant 0 : index
    %47 = vector.load %arg8[%c15, %c0_38] : memref<16x512xf32, #tpu.memory_space<vmem>>, vector<1x512xf32>
    tpu.vector_store %arg8[%c15, %c0_38], %46 {strides = array<i32>} : memref<16x512xf32, #tpu.memory_space<vmem>>, vector<1x512xf32>,
    %c11_39 = arith.constant 11 : index
    %c0_40 = arith.constant 0 : index
    %48 = vector.load %arg8[%c11_39, %c0_40] : memref<16x512xf32, #tpu.memory_space<vmem>>, vector<1x512xf32>
    %c48_i32_41 = arith.constant 48 : i32
    %49 = tpu.dynamic_rotate %48 by %c48_i32_41 dim 1 : vector<1x512xf32>, i32 -> vector<1x512xf32>
    %c8 = arith.constant 8 : index
    %c0_42 = arith.constant 0 : index
    %50 = vector.load %arg8[%c8, %c0_42] : memref<16x512xf32, #tpu.memory_space<vmem>>, vector<1x512xf32>
    tpu.vector_store %arg8[%c8, %c0_42], %49 {strides = array<i32>} : memref<16x512xf32, #tpu.memory_space<vmem>>, vector<1x512xf32>,
    %c32_i32_43 = arith.constant 32 : i32
    %51 = tpu.dynamic_rotate %48 by %c32_i32_43 dim 1 : vector<1x512xf32>, i32 -> vector<1x512xf32>
    %c9 = arith.constant 9 : index
    %c0_44 = arith.constant 0 : index
    %52 = vector.load %arg8[%c9, %c0_44] : memref<16x512xf32, #tpu.memory_space<vmem>>, vector<1x512xf32>
    tpu.vector_store %arg8[%c9, %c0_44], %51 {strides = array<i32>} : memref<16x512xf32, #tpu.memory_space<vmem>>, vector<1x512xf32>,
    %c16_i32_45 = arith.constant 16 : i32
    %53 = tpu.dynamic_rotate %48 by %c16_i32_45 dim 1 : vector<1x512xf32>, i32 -> vector<1x512xf32>
    %c10 = arith.constant 10 : index
    %c0_46 = arith.constant 0 : index
    %54 = vector.load %arg8[%c10, %c0_46] : memref<16x512xf32, #tpu.memory_space<vmem>>, vector<1x512xf32>
    tpu.vector_store %arg8[%c10, %c0_46], %53 {strides = array<i32>} : memref<16x512xf32, #tpu.memory_space<vmem>>, vector<1x512xf32>,
    %c496_i32_47 = arith.constant 496 : i32
    %55 = tpu.dynamic_rotate %48 by %c496_i32_47 dim 1 : vector<1x512xf32>, i32 -> vector<1x512xf32>
    %c12 = arith.constant 12 : index
    %c0_48 = arith.constant 0 : index
    %56 = vector.load %arg8[%c12, %c0_48] : memref<16x512xf32, #tpu.memory_space<vmem>>, vector<1x512xf32>
    tpu.vector_store %arg8[%c12, %c0_48], %55 {strides = array<i32>} : memref<16x512xf32, #tpu.memory_space<vmem>>, vector<1x512xf32>,
    %c480_i32_49 = arith.constant 480 : i32
    %57 = tpu.dynamic_rotate %48 by %c480_i32_49 dim 1 : vector<1x512xf32>, i32 -> vector<1x512xf32>
    %c13 = arith.constant 13 : index
    %c0_50 = arith.constant 0 : index
    %58 = vector.load %arg8[%c13, %c0_50] : memref<16x512xf32, #tpu.memory_space<vmem>>, vector<1x512xf32>
    tpu.vector_store %arg8[%c13, %c0_50], %57 {strides = array<i32>} : memref<16x512xf32, #tpu.memory_space<vmem>>, vector<1x512xf32>,
    %c464_i32_51 = arith.constant 464 : i32
    %59 = tpu.dynamic_rotate %48 by %c464_i32_51 dim 1 : vector<1x512xf32>, i32 -> vector<1x512xf32>
    %c14 = arith.constant 14 : index
    %c0_52 = arith.constant 0 : index
    %60 = vector.load %arg8[%c14, %c0_52] : memref<16x512xf32, #tpu.memory_space<vmem>>, vector<1x512xf32>
    tpu.vector_store %arg8[%c14, %c0_52], %59 {strides = array<i32>} : memref<16x512xf32, #tpu.memory_space<vmem>>, vector<1x512xf32>,
    %c0_53 = arith.constant 0 : index
    %c0_54 = arith.constant 0 : index
    %61 = vector.load %arg8[%c0_53, %c0_54] : memref<16x512xf32, #tpu.memory_space<vmem>>, vector<8x512xf32>
    %c8_55 = arith.constant 8 : index
    %c0_56 = arith.constant 0 : index
    %62 = vector.load %arg8[%c8_55, %c0_56] : memref<16x512xf32, #tpu.memory_space<vmem>>, vector<8x512xf32>
    %cst_57 = arith.constant 0.000000e+00 : f32
    %63 = vector.broadcast %cst_57 : f32 to vector<8x256xf32>
    %c3_i32 = arith.constant 3 : i32
    %64 = tpu.dynamic_rotate %61 by %c3_i32 dim 1 : vector<8x512xf32>, i32 -> vector<8x512xf32>
    %c3_i32_58 = arith.constant 3 : i32
    %65 = tpu.dynamic_rotate %62 by %c3_i32_58 dim 1 : vector<8x512xf32>, i32 -> vector<8x512xf32>
    %c0_59 = arith.constant 0 : index
    %c0_60 = arith.constant 0 : index
    %66 = vector.load %arg2[%c0_59, %c0_60] : memref<8x14xf32, #tpu.memory_space<vmem>>, vector<8x1xf32>
    %c0_61 = arith.constant 0 : index
    %c7_62 = arith.constant 7 : index
    %67 = vector.load %arg2[%c0_61, %c7_62] : memref<8x14xf32, #tpu.memory_space<vmem>>, vector<8x1xf32>
    %68 = vector.extract_strided_slice %64 {offsets = [0, 128], sizes = [8, 256], strides = [1, 1]} : vector<8x512xf32> to vector<8x256xf32>
    %69 = vector.broadcast %66 : vector<8x1xf32> to vector<8x256xf32>
    %70 = arith.mulf %68, %69 : vector<8x256xf32>
    %71 = vector.extract_strided_slice %65 {offsets = [0, 128], sizes = [8, 256], strides = [1, 1]} : vector<8x512xf32> to vector<8x256xf32>
    %72 = vector.broadcast %67 : vector<8x1xf32> to vector<8x256xf32>
    %73 = arith.mulf %71, %72 : vector<8x256xf32>
    %74 = arith.addf %70, %73 : vector<8x256xf32>
    %c0_63 = arith.constant 0 : index
    %c0_64 = arith.constant 0 : index
    %75 = vector.load %arg3[%c0_63, %c0_64] : memref<7x256xf32, #tpu.memory_space<vmem>>, vector<1x256xf32>
    %76 = vector.broadcast %75 : vector<1x256xf32> to vector<8x256xf32>
    %77 = arith.mulf %76, %74 : vector<8x256xf32>
    %78 = arith.addf %63, %77 : vector<8x256xf32>
    %c2_i32 = arith.constant 2 : i32
    %79 = tpu.dynamic_rotate %61 by %c2_i32 dim 1 : vector<8x512xf32>, i32 -> vector<8x512xf32>
    %c2_i32_65 = arith.constant 2 : i32
    %80 = tpu.dynamic_rotate %62 by %c2_i32_65 dim 1 : vector<8x512xf32>, i32 -> vector<8x512xf32>
    %c0_66 = arith.constant 0 : index
    %c1_67 = arith.constant 1 : index
    %81 = vector.load %arg2[%c0_66, %c1_67] : memref<8x14xf32, #tpu.memory_space<vmem>>, vector<8x1xf32>
    %c0_68 = arith.constant 0 : index
    %c8_69 = arith.constant 8 : index
    %82 = vector.load %arg2[%c0_68, %c8_69] : memref<8x14xf32, #tpu.memory_space<vmem>>, vector<8x1xf32>
    %83 = vector.extract_strided_slice %79 {offsets = [0, 128], sizes = [8, 256], strides = [1, 1]} : vector<8x512xf32> to vector<8x256xf32>
    %84 = vector.broadcast %81 : vector<8x1xf32> to vector<8x256xf32>
    %85 = arith.mulf %83, %84 : vector<8x256xf32>
    %86 = vector.extract_strided_slice %80 {offsets = [0, 128], sizes = [8, 256], strides = [1, 1]} : vector<8x512xf32> to vector<8x256xf32>
    %87 = vector.broadcast %82 : vector<8x1xf32> to vector<8x256xf32>
    %88 = arith.mulf %86, %87 : vector<8x256xf32>
    %89 = arith.addf %85, %88 : vector<8x256xf32>
    %c1_70 = arith.constant 1 : index
    %c0_71 = arith.constant 0 : index
    %90 = vector.load %arg3[%c1_70, %c0_71] : memref<7x256xf32, #tpu.memory_space<vmem>>, vector<1x256xf32>
    %91 = vector.broadcast %90 : vector<1x256xf32> to vector<8x256xf32>
    %92 = arith.mulf %91, %89 : vector<8x256xf32>
    %93 = arith.addf %78, %92 : vector<8x256xf32>
    %c1_i32 = arith.constant 1 : i32
    %94 = tpu.dynamic_rotate %61 by %c1_i32 dim 1 : vector<8x512xf32>, i32 -> vector<8x512xf32>
    %c1_i32_72 = arith.constant 1 : i32
    %95 = tpu.dynamic_rotate %62 by %c1_i32_72 dim 1 : vector<8x512xf32>, i32 -> vector<8x512xf32>
    %c0_73 = arith.constant 0 : index
    %c2_74 = arith.constant 2 : index
    %96 = vector.load %arg2[%c0_73, %c2_74] : memref<8x14xf32, #tpu.memory_space<vmem>>, vector<8x1xf32>
    %c0_75 = arith.constant 0 : index
    %c9_76 = arith.constant 9 : index
    %97 = vector.load %arg2[%c0_75, %c9_76] : memref<8x14xf32, #tpu.memory_space<vmem>>, vector<8x1xf32>
    %98 = vector.extract_strided_slice %94 {offsets = [0, 128], sizes = [8, 256], strides = [1, 1]} : vector<8x512xf32> to vector<8x256xf32>
    %99 = vector.broadcast %96 : vector<8x1xf32> to vector<8x256xf32>
    %100 = arith.mulf %98, %99 : vector<8x256xf32>
    %101 = vector.extract_strided_slice %95 {offsets = [0, 128], sizes = [8, 256], strides = [1, 1]} : vector<8x512xf32> to vector<8x256xf32>
    %102 = vector.broadcast %97 : vector<8x1xf32> to vector<8x256xf32>
    %103 = arith.mulf %101, %102 : vector<8x256xf32>
    %104 = arith.addf %100, %103 : vector<8x256xf32>
    %c2_77 = arith.constant 2 : index
    %c0_78 = arith.constant 0 : index
    %105 = vector.load %arg3[%c2_77, %c0_78] : memref<7x256xf32, #tpu.memory_space<vmem>>, vector<1x256xf32>
    %106 = vector.broadcast %105 : vector<1x256xf32> to vector<8x256xf32>
    %107 = arith.mulf %106, %104 : vector<8x256xf32>
    %108 = arith.addf %93, %107 : vector<8x256xf32>
    %c0_79 = arith.constant 0 : index
    %c3_80 = arith.constant 3 : index
    %109 = vector.load %arg2[%c0_79, %c3_80] : memref<8x14xf32, #tpu.memory_space<vmem>>, vector<8x1xf32>
    %c0_81 = arith.constant 0 : index
    %c10_82 = arith.constant 10 : index
    %110 = vector.load %arg2[%c0_81, %c10_82] : memref<8x14xf32, #tpu.memory_space<vmem>>, vector<8x1xf32>
    %111 = vector.extract_strided_slice %61 {offsets = [0, 128], sizes = [8, 256], strides = [1, 1]} : vector<8x512xf32> to vector<8x256xf32>
    %112 = vector.broadcast %109 : vector<8x1xf32> to vector<8x256xf32>
    %113 = arith.mulf %111, %112 : vector<8x256xf32>
    %114 = vector.extract_strided_slice %62 {offsets = [0, 128], sizes = [8, 256], strides = [1, 1]} : vector<8x512xf32> to vector<8x256xf32>
    %115 = vector.broadcast %110 : vector<8x1xf32> to vector<8x256xf32>
    %116 = arith.mulf %114, %115 : vector<8x256xf32>
    %117 = arith.addf %113, %116 : vector<8x256xf32>
    %c3_83 = arith.constant 3 : index
    %c0_84 = arith.constant 0 : index
    %118 = vector.load %arg3[%c3_83, %c0_84] : memref<7x256xf32, #tpu.memory_space<vmem>>, vector<1x256xf32>
    %119 = vector.broadcast %118 : vector<1x256xf32> to vector<8x256xf32>
    %120 = arith.mulf %119, %117 : vector<8x256xf32>
    %121 = arith.addf %108, %120 : vector<8x256xf32>
    %c511_i32 = arith.constant 511 : i32
    %122 = tpu.dynamic_rotate %61 by %c511_i32 dim 1 : vector<8x512xf32>, i32 -> vector<8x512xf32>
    %c511_i32_85 = arith.constant 511 : i32
    %123 = tpu.dynamic_rotate %62 by %c511_i32_85 dim 1 : vector<8x512xf32>, i32 -> vector<8x512xf32>
    %c0_86 = arith.constant 0 : index
    %c4_87 = arith.constant 4 : index
    %124 = vector.load %arg2[%c0_86, %c4_87] : memref<8x14xf32, #tpu.memory_space<vmem>>, vector<8x1xf32>
    %c0_88 = arith.constant 0 : index
    %c11_89 = arith.constant 11 : index
    %125 = vector.load %arg2[%c0_88, %c11_89] : memref<8x14xf32, #tpu.memory_space<vmem>>, vector<8x1xf32>
    %126 = vector.extract_strided_slice %122 {offsets = [0, 128], sizes = [8, 256], strides = [1, 1]} : vector<8x512xf32> to vector<8x256xf32>
    %127 = vector.broadcast %124 : vector<8x1xf32> to vector<8x256xf32>
    %128 = arith.mulf %126, %127 : vector<8x256xf32>
    %129 = vector.extract_strided_slice %123 {offsets = [0, 128], sizes = [8, 256], strides = [1, 1]} : vector<8x512xf32> to vector<8x256xf32>
    %130 = vector.broadcast %125 : vector<8x1xf32> to vector<8x256xf32>
    %131 = arith.mulf %129, %130 : vector<8x256xf32>
    %132 = arith.addf %128, %131 : vector<8x256xf32>
    %c4_90 = arith.constant 4 : index
    %c0_91 = arith.constant 0 : index
    %133 = vector.load %arg3[%c4_90, %c0_91] : memref<7x256xf32, #tpu.memory_space<vmem>>, vector<1x256xf32>
    %134 = vector.broadcast %133 : vector<1x256xf32> to vector<8x256xf32>
    %135 = arith.mulf %134, %132 : vector<8x256xf32>
    %136 = arith.addf %121, %135 : vector<8x256xf32>
    %c510_i32 = arith.constant 510 : i32
    %137 = tpu.dynamic_rotate %61 by %c510_i32 dim 1 : vector<8x512xf32>, i32 -> vector<8x512xf32>
    %c510_i32_92 = arith.constant 510 : i32
    %138 = tpu.dynamic_rotate %62 by %c510_i32_92 dim 1 : vector<8x512xf32>, i32 -> vector<8x512xf32>
    %c0_93 = arith.constant 0 : index
    %c5_94 = arith.constant 5 : index
    %139 = vector.load %arg2[%c0_93, %c5_94] : memref<8x14xf32, #tpu.memory_space<vmem>>, vector<8x1xf32>
    %c0_95 = arith.constant 0 : index
    %c12_96 = arith.constant 12 : index
    %140 = vector.load %arg2[%c0_95, %c12_96] : memref<8x14xf32, #tpu.memory_space<vmem>>, vector<8x1xf32>
    %141 = vector.extract_strided_slice %137 {offsets = [0, 128], sizes = [8, 256], strides = [1, 1]} : vector<8x512xf32> to vector<8x256xf32>
    %142 = vector.broadcast %139 : vector<8x1xf32> to vector<8x256xf32>
    %143 = arith.mulf %141, %142 : vector<8x256xf32>
    %144 = vector.extract_strided_slice %138 {offsets = [0, 128], sizes = [8, 256], strides = [1, 1]} : vector<8x512xf32> to vector<8x256xf32>
    %145 = vector.broadcast %140 : vector<8x1xf32> to vector<8x256xf32>
    %146 = arith.mulf %144, %145 : vector<8x256xf32>
    %147 = arith.addf %143, %146 : vector<8x256xf32>
    %c5_97 = arith.constant 5 : index
    %c0_98 = arith.constant 0 : index
    %148 = vector.load %arg3[%c5_97, %c0_98] : memref<7x256xf32, #tpu.memory_space<vmem>>, vector<1x256xf32>
    %149 = vector.broadcast %148 : vector<1x256xf32> to vector<8x256xf32>
    %150 = arith.mulf %149, %147 : vector<8x256xf32>
    %151 = arith.addf %136, %150 : vector<8x256xf32>
    %c509_i32 = arith.constant 509 : i32
    %152 = tpu.dynamic_rotate %61 by %c509_i32 dim 1 : vector<8x512xf32>, i32 -> vector<8x512xf32>
    %c509_i32_99 = arith.constant 509 : i32
    %153 = tpu.dynamic_rotate %62 by %c509_i32_99 dim 1 : vector<8x512xf32>, i32 -> vector<8x512xf32>
    %c0_100 = arith.constant 0 : index
    %c6_101 = arith.constant 6 : index
    %154 = vector.load %arg2[%c0_100, %c6_101] : memref<8x14xf32, #tpu.memory_space<vmem>>, vector<8x1xf32>
    %c0_102 = arith.constant 0 : index
    %c13_103 = arith.constant 13 : index
    %155 = vector.load %arg2[%c0_102, %c13_103] : memref<8x14xf32, #tpu.memory_space<vmem>>, vector<8x1xf32>
    %156 = vector.extract_strided_slice %152 {offsets = [0, 128], sizes = [8, 256], strides = [1, 1]} : vector<8x512xf32> to vector<8x256xf32>
    %157 = vector.broadcast %154 : vector<8x1xf32> to vector<8x256xf32>
    %158 = arith.mulf %156, %157 : vector<8x256xf32>
    %159 = vector.extract_strided_slice %153 {offsets = [0, 128], sizes = [8, 256], strides = [1, 1]} : vector<8x512xf32> to vector<8x256xf32>
    %160 = vector.broadcast %155 : vector<8x1xf32> to vector<8x256xf32>
    %161 = arith.mulf %159, %160 : vector<8x256xf32>
    %162 = arith.addf %158, %161 : vector<8x256xf32>
    %c6_104 = arith.constant 6 : index
    %c0_105 = arith.constant 0 : index
    %163 = vector.load %arg3[%c6_104, %c0_105] : memref<7x256xf32, #tpu.memory_space<vmem>>, vector<1x256xf32>
    %164 = vector.broadcast %163 : vector<1x256xf32> to vector<8x256xf32>
    %165 = arith.mulf %164, %162 : vector<8x256xf32>
    %166 = arith.addf %151, %165 : vector<8x256xf32>
    %cst_106 = arith.constant dense<0.000000e+00> : vector<256xf32>
    %167 = vector.multi_reduction <add>, %166, %cst_106 [0] : vector<8x256xf32> to vector<256xf32>
    %168 = vector.shape_cast %167 : vector<256xf32> to vector<1x256xf32>
    %c0_107 = arith.constant 0 : index
    %169 = memref.load %arg1[%c0_107] : memref<2xf32, #tpu.memory_space<smem>>
    %170 = vector.broadcast %169 : f32 to vector<1x256xf32>
    %171 = arith.mulf %168, %170 : vector<1x256xf32>
    %c1_108 = arith.constant 1 : index
    %172 = memref.load %arg1[%c1_108] : memref<2xf32, #tpu.memory_space<smem>>
    %173 = vector.broadcast %172 : f32 to vector<1x256xf32>
    %174 = arith.addf %171, %173 : vector<1x256xf32>
    %175 = arith.negf %174 : vector<1x256xf32>
    %176 = math.exp %175 : vector<1x256xf32>
    %cst_109 = arith.constant 1.000000e+00 : f32
    %177 = vector.broadcast %cst_109 : f32 to vector<1x256xf32>
    %178 = arith.addf %177, %176 : vector<1x256xf32>
    %179 = arith.divf %177, %178 : vector<1x256xf32>
    %180 = vector.shape_cast %179 : vector<1x256xf32> to vector<1x256xf32>
    %181 = vector.broadcast %180 : vector<1x256xf32> to vector<4x256xf32>
    %c0_110 = arith.constant 0 : index
    %c0_111 = arith.constant 0 : index
    %182 = vector.load %arg6[%c0_110, %c0_111] : memref<4x256xf32, #tpu.memory_space<vmem>>, vector<4x256xf32>
    %183 = arith.mulf %182, %181 : vector<4x256xf32>
    %c0_112 = arith.constant 0 : index
    %c0_113 = arith.constant 0 : index
    %c0_114 = arith.constant 0 : index
    %184 = vector.load %arg7[%c0_112, %c0_113, %c0_114] : memref<2x4x256xf32, #tpu.memory_space<vmem>>, vector<1x4x256xf32>
    %185 = vector.shape_cast %184 : vector<1x4x256xf32> to vector<4x256xf32>
    %186 = vector.shape_cast %183 : vector<4x256xf32> to vector<1x4x256xf32>
    tpu.vector_store %arg7[%c0_112, %c0_113, %c0_114], %186 {strides = array<i32>} : memref<2x4x256xf32, #tpu.memory_space<vmem>>, vector<1x4x256xf32>,
    %c0_i32_115 = arith.constant 0 : i32
    %c0_i32_116 = arith.constant 0 : i32
    %c0_i32_117 = arith.constant 0 : i32
    %c0_i32_118 = arith.constant 0 : i32
    %187 = tpu.memref_slice %arg7[%c0_i32_115, %c0_i32_117, %c0_i32_118] : memref<2x4x256xf32, #tpu.memory_space<vmem>> -> memref<1x4x256xf32, #tpu.memory_space<vmem>>
    %188 = tpu.memref_squeeze %187 : memref<1x4x256xf32, #tpu.memory_space<vmem>> -> memref<4x256xf32, #tpu.memory_space<vmem>>
    %c0_i32_119 = arith.constant 0 : i32
    %c0_i32_120 = arith.constant 0 : i32
    %189 = tpu.memref_slice %arg5[%arg0, %c0_i32_119, %c0_i32_120] : memref<2x4x256xf32, #tpu.memory_space<any>> -> memref<1x4x256xf32, #tpu.memory_space<any>>
    %190 = tpu.memref_squeeze %189 : memref<1x4x256xf32, #tpu.memory_space<any>> -> memref<4x256xf32, #tpu.memory_space<any>>
    %191 = tpu.memref_slice %arg10[%c0_i32_116] : memref<2x!tpu.dma_semaphore, #tpu.memory_space<semaphore_mem>> -> memref<1x!tpu.dma_semaphore, #tpu.memory_space<semaphore_mem>>
    %192 = tpu.memref_squeeze %191 : memref<1x!tpu.dma_semaphore, #tpu.memory_space<semaphore_mem>> -> memref<!tpu.dma_semaphore, #tpu.memory_space<semaphore_mem>>
    tpu.enqueue_dma source(%188 : memref<4x256xf32, #tpu.memory_space<vmem>>) target(%190 : memref<4x256xf32, #tpu.memory_space<any>>) target_semaphore(%192 : memref<!tpu.dma_semaphore, #tpu.memory_space<semaphore_mem>>)
    %c0_i32_121 = arith.constant 0 : i32
    %c0_i32_122 = arith.constant 0 : i32
    %c0_i32_123 = arith.constant 0 : i32
    %c0_i32_124 = arith.constant 0 : i32
    %193 = tpu.memref_slice %arg7[%c0_i32_121, %c0_i32_123, %c0_i32_124] : memref<2x4x256xf32, #tpu.memory_space<vmem>> -> memref<1x4x256xf32, #tpu.memory_space<vmem>>
    %194 = tpu.memref_squeeze %193 : memref<1x4x256xf32, #tpu.memory_space<vmem>> -> memref<4x256xf32, #tpu.memory_space<vmem>>
    %c0_i32_125 = arith.constant 0 : i32
    %c0_i32_126 = arith.constant 0 : i32
    %195 = tpu.memref_slice %arg5[%arg0, %c0_i32_125, %c0_i32_126] : memref<2x4x256xf32, #tpu.memory_space<any>> -> memref<1x4x256xf32, #tpu.memory_space<any>>
    %196 = tpu.memref_squeeze %195 : memref<1x4x256xf32, #tpu.memory_space<any>> -> memref<4x256xf32, #tpu.memory_space<any>>
    %197 = tpu.memref_slice %arg10[%c0_i32_122] : memref<2x!tpu.dma_semaphore, #tpu.memory_space<semaphore_mem>> -> memref<1x!tpu.dma_semaphore, #tpu.memory_space<semaphore_mem>>
    %198 = tpu.memref_squeeze %197 : memref<1x!tpu.dma_semaphore, #tpu.memory_space<semaphore_mem>> -> memref<!tpu.dma_semaphore, #tpu.memory_space<semaphore_mem>>
    tpu.wait_dma2 semaphore(%198 : memref<!tpu.dma_semaphore, #tpu.memory_space<semaphore_mem>>) src(%194 : memref<4x256xf32, #tpu.memory_space<vmem>>) dst(%196 : memref<4x256xf32, #tpu.memory_space<any>>)
    return
  }
  func.func @transform_0(%arg0: i32) -> i32 {
    %c0_i32 = arith.constant 0 : i32
    %c0_i32_0 = arith.constant 0 : i32
    return %c0_i32 : i32
  }
  func.func @transform_1(%arg0: i32) -> (i32, i32) {
    %c0_i32 = arith.constant 0 : i32
    %c0_i32_0 = arith.constant 0 : i32
    %c0_i32_1 = arith.constant 0 : i32
    return %c0_i32, %c0_i32_0 : i32, i32
  }
  func.func @transform_2(%arg0: i32) -> (i32, i32) {
    %c0_i32 = arith.constant 0 : i32
    %c0_i32_0 = arith.constant 0 : i32
    %c0_i32_1 = arith.constant 0 : i32
    return %c0_i32, %c0_i32_0 : i32, i32
  }
}

</mosaic_0001>

<llo_original>
// kernel: tpu_custom_call.1
$region0: #{tpu_custom_call.1}
  #allocation0 [shape = 'u32[]', space=smem, size = 0x4, offset = 0x4, fixed_abs, tag = 'smem constant byte address 0x4 - core index']
  #allocation1 [shape = 'u32[72,128]{1,0:T(1,128)}', space=vmem, size = 0x9000, scoped, tag = 'internal scratch']
  #allocation2 [shape = 'f32[4,256]{1,0:T(4,128)}', space=vmem, size = 0x1000, scoped, tag = 'scratch operand']
  #allocation3 [shape = 'f32[2,4,256]{2,1,0:T(4,128)}', space=vmem, size = 0x2000, scoped, tag = 'scratch operand']
  #allocation4 [shape = 'f32[16,512]{1,0:T(8,128)}', space=vmem, size = 0x8000, scoped, tag = 'scratch operand']
  #allocation5 [shape = 's32[2]{0}', space=sflag, size = 0x8, scoped, tag = 'scratch operand']
  #allocation6 [shape = 's32[2]{0}', space=sflag, size = 0x8, scoped, tag = 'scratch operand']
  #allocation13 [shape = 's32[]', space=sflag, size = 0x4, offset = 0, fixed_abs, tag = 'sflag constant byte address 0x0 - dummy sync flag']
  #allocation14 [shape = 's32[]', space=sflag, size = 0x4, offset = 0, fixed_abs, tag = 'sflag constant byte address 0x0 - dummy sync flag']
  #allocation15 [shape = 'u32[]', space=smem, size = 0x4, offset = 0x44, fixed_abs, tag = 'smem constant byte address 0x44 - assertion arg 0']
  #allocation16 [shape = 'u32[]', space=smem, size = 0x4, offset = 0x48, fixed_abs, tag = 'smem constant byte address 0x48 - assertion arg 1']
  #allocation17 [shape = 's32[]', space=sflag, size = 0x4, offset = 0, fixed_abs, tag = 'sflag constant byte address 0x0 - dummy sync flag']
  #allocation18 [shape = 's32[]', space=sflag, size = 0x4, offset = 0, fixed_abs, tag = 'sflag constant byte address 0x0 - dummy sync flag']
  %s0 = inlined_call_operand.hbm [shape: f32[2], index: 0, kind: input, shape index: {}]
  %s1 = inlined_call_operand.hbm [shape: f32[8,14], index: 1, kind: input, shape index: {}]
  %s2 = inlined_call_operand.hbm [shape: f32[7,256], index: 2, kind: input, shape index: {}]
  %s3 = inlined_call_operand.hbm [shape: f32[2,4,256], index: 3, kind: input, shape index: {}]
  %s4 = inlined_call_operand.hbm [shape: f32[2,4,256], index: 4, kind: output, shape index: {}]
  %s5 = sld [smem:[#allocation0]]
  $region53: #{tpu_custom_call.1} parent=0
    _
  %s7 = ssub.s32 1, %s5
  %s8 = scalar_select 0, %s7, %s5
  $region1: #{tpu_custom_call.1} parent=0
    #allocation7 [shape = 'u8[512]{0}', space=smem, size = 0x200, scoped, tag = 'input window, operand 0, single buffered']
    #allocation8 [shape = 's32[2]{0}', space=sflag, size = 0x8, scoped, tag = 'scoped memory for tpu_custom_call.1']
    #allocation9 [shape = 's32[2]{0}', space=sflag, size = 0x8, scoped, tag = 'scoped memory for tpu_custom_call.1']
    #allocation10 [shape = 'u8[4096]{0}', space=vmem, size = 0x1000, scoped, tag = 'input window, operand 1, single buffered']
    #allocation11 [shape = 'u8[8192]{0}', space=vmem, size = 0x2000, scoped, tag = 'input window, operand 2, single buffered']
    #allocation12 [shape = 's32[1]{0}', space=sflag, size = 0x4, scoped, tag = 'scoped memory for tpu_custom_call.1']
    %9 = vsyncpa [#allocation9], 0
    %10 = vsyncpa [#allocation8], 0
    %11 = vsyncpa [#allocation12], 0
    loop: start=0, step=1, limit=3
    $region2: #{tpu_custom_call.1} parent=1 // loop_pre_header
      _
    $region3: #{tpu_custom_call.1} parent=1 // loop_header
      %s13 = sphi 0, %s17
      %p14 = scmp.ge.s32.totalorder %s13, 3
      %s20 = sphi 0, %s20
      %s22 = sphi 0, %s20
      %s30 = sphi 0, %s22
      %s34 = sphi 0, %s34
      %s36 = sphi 0, %s34
      %s44 = sphi 0, %s36
      %s48 = sphi 0, %s48
      %s50 = sphi 0, %s48
      %s58 = sphi 0, %s50
    $region4: #{tpu_custom_call.1} parent=1 // loop_header_branch
      %16 = sbr.rel (%p14) target = $region8
    $region5: #{tpu_custom_call.1} parent=1 // loop_body
      %s18 = ssub.s32 %s13, 1
      %s19 = sadd.s32 %s13, 1
      %s21 = sadd.s32 %s20, 1
      %p23 = scmp.eq.s32.totalorder %s13, 1
      %p24 = scmp.ne.s32.totalorder %s20, %s22
      %p25 = scmp.eq.s32.totalorder %s13, 0
      %p26 = por %p24, %p25
      %p27 = scmp.ne.s32.totalorder %s20, %s22
      %p28 = scmp.eq.s32.totalorder %s18, 1
      %p29 = por %p27, %p28
      %p31 = scmp.ne.s32.totalorder %s22, %s30
      %p32 = scmp.eq.s32.totalorder %s18, 0
      %p33 = por %p31, %p32
      %s35 = sadd.s32 %s34, 1
      %p37 = scmp.eq.s32.totalorder %s13, 1
      %p38 = scmp.ne.s32.totalorder %s34, %s36
      %p39 = scmp.eq.s32.totalorder %s13, 0
      %p40 = por %p38, %p39
      %p41 = scmp.ne.s32.totalorder %s34, %s36
      %p42 = scmp.eq.s32.totalorder %s18, 1
      %p43 = por %p41, %p42
      %p45 = scmp.ne.s32.totalorder %s36, %s44
      %p46 = scmp.eq.s32.totalorder %s18, 0
      %p47 = por %p45, %p46
      %s49 = sadd.s32 %s48, 1
      %p51 = scmp.eq.s32.totalorder %s13, 1
      %p52 = scmp.ne.s32.totalorder %s48, %s50
      %p53 = scmp.eq.s32.totalorder %s13, 0
      %p54 = por %p52, %p53
      %p55 = scmp.ne.s32.totalorder %s48, %s50
      %p56 = scmp.eq.s32.totalorder %s18, 1
      %p57 = por %p55, %p56
      %p59 = scmp.ne.s32.totalorder %s50, %s58
      %p60 = scmp.eq.s32.totalorder %s18, 0
      %p61 = por %p59, %p60
      %p62 = scmp.le.s32.totalorder 1, %s13
      // Predicated region
      $region9: #{tpu_custom_call.1} parent=5 // pred_check
        %p63 = pneg %p62
      $region10: #{tpu_custom_call.1} parent=5 // pred_check_branch
        %65 = sbr.rel (%p63) target = $region12
      $region11: #{tpu_custom_call.1} parent=5 // pred_region
        %s66 = ssub.s32 %s13, 1
        // Predicated region
        $region13: #{tpu_custom_call.1} parent=11 // pred_check
          %p67 = pneg %p33
        $region14: #{tpu_custom_call.1} parent=11 // pred_check_branch
          %69 = sbr.rel (%p67) target = $region16
        $region15: #{tpu_custom_call.1} parent=11 // pred_region
          %71 = vsyncadd [#allocation9], 0
          %s73 = sshll.u32 %s0, 4
          %s74 = int_to_ptr.hbm [resolvable:$true] %s73
          %76 = dma.hbm_to_smem %s74, 16, [#allocation7], [#allocation9]
        $region16: #{tpu_custom_call.1} parent=11 // pred_fallthru
          _
        // Predicated region
        $region17: #{tpu_custom_call.1} parent=11 // pred_check
          %p77 = pneg %p47
        $region18: #{tpu_custom_call.1} parent=11 // pred_check_branch
          %79 = sbr.rel (%p77) target = $region20
        $region19: #{tpu_custom_call.1} parent=11 // pred_region
          %81 = vsyncadd [#allocation8], 0
          %s83 = sshll.u32 %s1, 4
          %s84 = int_to_ptr.hbm [resolvable:$true] %s83
          %s85 = sshll.u32 [#allocation10], 4
          %s86 = int_to_ptr.vmem [resolvable:$true] %s85
          %88 = dma.hbm_to_vmem [thread:$0]  %s84, 128, %s86, [#allocation8]
        $region20: #{tpu_custom_call.1} parent=11 // pred_fallthru
          _
        // Predicated region
        $region21: #{tpu_custom_call.1} parent=11 // pred_check
          %p89 = pneg %p61
        $region22: #{tpu_custom_call.1} parent=11 // pred_check_branch
          %91 = sbr.rel (%p89) target = $region24
        $region23: #{tpu_custom_call.1} parent=11 // pred_region
          %93 = vsyncadd [#allocation12], 0
          %s95 = sshll.u32 %s2, 4
          %s96 = int_to_ptr.hbm [resolvable:$true] %s95
          %s97 = sshll.u32 [#allocation11], 4
          %s98 = int_to_ptr.vmem [resolvable:$true] %s97
          %100 = dma.hbm_to_vmem [thread:$0]  %s96, 256, %s98, [#allocation12]
        $region24: #{tpu_custom_call.1} parent=11 // pred_fallthru
          _
      $region12: #{tpu_custom_call.1} parent=5 // pred_fallthru
        _
      %p101 = scmp.lt.s32.totalorder %s13, 2
      // Predicated region
      $region25: #{tpu_custom_call.1} parent=5 // pred_check
        %p102 = pneg %p101
      $region26: #{tpu_custom_call.1} parent=5 // pred_check_branch
        %104 = sbr.rel (%p102) target = $region28
      $region27: #{tpu_custom_call.1} parent=5 // pred_region
        _
      $region28: #{tpu_custom_call.1} parent=5 // pred_fallthru
        _
      %p105 = scmp.le.s32.totalorder 1, %s13
      // Predicated region
      $region29: #{tpu_custom_call.1} parent=5 // pred_check
        %p106 = pneg %p105
      $region30: #{tpu_custom_call.1} parent=5 // pred_check_branch
        %108 = sbr.rel (%p106) target = $region32
      $region31: #{tpu_custom_call.1} parent=5 // pred_region
        %s109 = ssub.s32 %s13, 1
        // Predicated region
        $region33: #{tpu_custom_call.1} parent=31 // pred_check
          %p110 = pneg %p33
        $region34: #{tpu_custom_call.1} parent=31 // pred_check_branch
          %112 = sbr.rel (%p110) target = $region36
        $region35: #{tpu_custom_call.1} parent=31 // pred_region
          %114 = dma.done [#allocation9], 16
        $region36: #{tpu_custom_call.1} parent=31 // pred_fallthru
          _
        // Predicated region
        $region37: #{tpu_custom_call.1} parent=31 // pred_check
          %p115 = pneg %p47
        $region38: #{tpu_custom_call.1} parent=31 // pred_check_branch
          %117 = sbr.rel (%p115) target = $region40
        $region39: #{tpu_custom_call.1} parent=31 // pred_region
          %119 = dma.done [#allocation8], 128
        $region40: #{tpu_custom_call.1} parent=31 // pred_fallthru
          _
        // Predicated region
        $region41: #{tpu_custom_call.1} parent=31 // pred_check
          %p120 = pneg %p61
        $region42: #{tpu_custom_call.1} parent=31 // pred_check_branch
          %122 = sbr.rel (%p120) target = $region44
        $region43: #{tpu_custom_call.1} parent=31 // pred_region
          %124 = dma.done [#allocation12], 256
        $region44: #{tpu_custom_call.1} parent=31 // pred_fallthru
          _
        %125 = sfence
        %p126 = pneg %p33
        %p127 = pneg %p29
        %p128 = pneg %p47
        %p129 = pneg %p43
        %p130 = pneg %p61
        %p131 = pneg %p57
        %s132 = smul.u32 %s18, 2
        %s133 = smul.addr %s132, 4
        %s134 = scalar_lea.hbm %s3, %s133
        // Predicated region
        $region45: #{tpu_custom_call.1} parent=31 // pred_check
          _
        $region46: #{tpu_custom_call.1} parent=31 // pred_check_branch
          %136 = sbr.rel target = $region48
        $region47: #{tpu_custom_call.1} parent=31 // pred_region
          %137 = sst [smem:[#allocation15]] [#allocation14]
          %138 = sst [smem:[#allocation16]] [#allocation13]
        $region48: #{tpu_custom_call.1} parent=31 // pred_fallthru
          _
        %140 = shalt.err (0)
        %s142 = sshll.u32 %s134, 4
        %s143 = int_to_ptr.hbm [resolvable:$true] %s142
        %s144 = sshll.u32 [#allocation2], 4
        %s145 = int_to_ptr.vmem [resolvable:$true] %s144
        %147 = dma.hbm_to_vmem [thread:$0]  %s143, 128, %s145, [#allocation5]
        %s148 = smul.u32 4, 1
        %s149 = smul.u32 %s148, 2
        %s150 = sshll.u32 %s149, 4
        %151 = dma.done [#allocation5], %s150
        %v152 = vld [vmem:[#allocation2] sm:$0xff]
        %v153 = vadd.f32 %v152, 0.0
        %155 = vst [vmem:[#allocation1] ss:$2 sm:$0xff] %v152
        %v156 = vld.sshfl [vmem:[#allocation1] sm:$0xff pattern:$0x75316420]
        %v157 = vld.sshfl [vmem:[#allocation1 + $0x8] sm:$0xff pattern:$0x75316420]
        %vm160 = vcmask 1043456
        %v161 = vsel %vm160, %v156, -inf
        %v162 = vrot.slane %v161, 4
        %v163 = vmax.f32 %v161, %v162
        %v164 = vrot.slane %v163, 2
        %v165 = vmax.f32 %v163, %v164
        %v166 = vrot.slane %v165, 1
        %v167 = vmax.f32 %v165, %v166
        %v168 = vsel %vm160, %v157, -inf
        %v169 = vrot.slane %v168, 4
        %v170 = vmax.f32 %v168, %v169
        %v171 = vrot.slane %v170, 2
        %v172 = vmax.f32 %v170, %v171
        %v173 = vrot.slane %v172, 1
        %v174 = vmax.f32 %v172, %v173
        %176 = vst [vmem:[#allocation1] ss:$2 sm:$0xff] %v153
        %v177 = vld.sshfl [vmem:[#allocation1] sm:$0xff pattern:$0x75316420]
        %v178 = vld.sshfl [vmem:[#allocation1 + $0x8] sm:$0xff pattern:$0x75316420]
        %v181 = vsel %vm160, %v177, 0.0
        %v182 = vrot.slane %v181, 4
        %v183 = vadd.f32 %v181, %v182
        %v184 = vrot.slane %v183, 2
        %v185 = vadd.f32 %v183, %v184
        %v186 = vrot.slane %v185, 1
        %v187 = vadd.f32 %v185, %v186
        %v188 = vsel %vm160, %v178, 0.0
        %v189 = vrot.slane %v188, 4
        %v190 = vadd.f32 %v188, %v189
        %v191 = vrot.slane %v190, 2
        %v192 = vadd.f32 %v190, %v191
        %v193 = vrot.slane %v192, 1
        %v194 = vadd.f32 %v192, %v193
        %v195 = vmul.f32 %v187, 0.25
        %v196 = vmul.f32 %v194, 0.25
        %197 = vst [vmem:[#allocation4 + $0x3] sm:$0x1] 0.0
        %198 = vst [vmem:[#allocation4 + $0x1b] sm:$0x1] 0.0
        %v201 = vrot.slane %v174, 7
        %vm202 = vcmask 1040384
        %v203 = vsel %vm202, %v167, %v201
        %v205 = vlaneseq
        %vm206 = vcmp.ge.s32.totalorder %v205, 0
        %vm207 = vcmp.lt.s32.totalorder %v205, 256
        %vm208 = vmand %vm206, %vm207
        %s209 = scalar_lea.vmem [#allocation4], 11
        %210 = vst.msk [vmem:[%s209] ss:$8 sm:$0x3] %vm208, %v203
        %211 = vst.msk [vmem:[%s209] ss:$8 sm:$0x0] %vm208, %v203
        %vm212 = vcmp.lt.s32.totalorder %v205, 512
        %vm213 = vmand %vm206, %vm212
        %s214 = scalar_lea.vmem [#allocation4], 7
        %215 = vst.msk [vmem:[%s214] ss:$8 sm:$0xf] %vm213, 0.0
        %216 = vst.msk [vmem:[%s214] ss:$8 sm:$0x0] %vm213, 0.0
        %s217 = scalar_lea.vmem [#allocation4], 3
        %v218 = vld [vmem:[%s217] ss:$8 sm:$0xf]
        %v220 = vperm.slane %v218, 0
        %v221 = vperm.slane %v218, 1
        %v222 = vperm.slane %v218, 2
        %v223 = vperm.slane %v218, 3
        %228 = vrot.lane.b32.xlu0 %v220, 48
        %v229 = vpop.permute.xlu0 %228
        %230 = vrot.lane.b32.xlu0 %v221, 48
        %v231 = vpop.permute.xlu0 %230
        %232 = vrot.lane.b32.xlu0 %v222, 48
        %v233 = vpop.permute.xlu0 %232
        %234 = vrot.lane.b32.xlu0 %v223, 48
        %v235 = vpop.permute.xlu0 %234
        %v236 = vlaneseq
        %v237 = vand.u32 %v236, 127
        %vm238 = vcmp.lt.s32.totalorder %v237, 48
        %v239 = vsel %vm238, %v233, %v235
        %v240 = vsel %vm238, %v231, %v233
        %v241 = vsel %vm238, %v229, %v231
        %v242 = vsel %vm238, %v235, %v229
        %v247 = vrot.slane %v241, 7
        %v248 = vrot.slane %v240, 6
        %v249 = vrot.slane %v239, 5
        %v250 = vsel %vm202, %v242, %v247
        %vm251 = vcmask 1042434
        %v252 = vsel %vm251, %v248, %v249
        %vm253 = vcmask 1041408
        %v254 = vsel %vm253, %v250, %v252
        %256 = vst.msk [vmem:[#allocation4] ss:$8 sm:$0xf] %vm213, %v254
        %257 = vst.msk [vmem:[#allocation4] ss:$8 sm:$0x0] %vm213, %v254
        %258 = vrot.lane.b32.xlu0 %v220, 32
        %v259 = vpop.permute.xlu0 %258
        %260 = vrot.lane.b32.xlu0 %v221, 32
        %v261 = vpop.permute.xlu0 %260
        %262 = vrot.lane.b32.xlu0 %v222, 32
        %v263 = vpop.permute.xlu0 %262
        %264 = vrot.lane.b32.xlu0 %v223, 32
        %v265 = vpop.permute.xlu0 %264
        %vm266 = vcmp.lt.s32.totalorder %v237, 32
        %v267 = vsel %vm266, %v263, %v265
        %v268 = vsel %vm266, %v261, %v263
        %v269 = vsel %vm266, %v259, %v261
        %v270 = vsel %vm266, %v265, %v259
        %v275 = vrot.slane %v269, 7
        %v276 = vrot.slane %v268, 6
        %v277 = vrot.slane %v267, 5
        %v278 = vsel %vm202, %v270, %v275
        %v279 = vsel %vm251, %v276, %v277
        %v280 = vsel %vm253, %v278, %v279
        %s282 = scalar_lea.vmem [#allocation4], 1
        %283 = vst.msk [vmem:[%s282] ss:$8 sm:$0xf] %vm213, %v280
        %284 = vst.msk [vmem:[%s282] ss:$8 sm:$0x0] %vm213, %v280
        %285 = vrot.lane.b32.xlu0 %v220, 16
        %v286 = vpop.permute.xlu0 %285
        %287 = vrot.lane.b32.xlu0 %v221, 16
        %v288 = vpop.permute.xlu0 %287
        %289 = vrot.lane.b32.xlu0 %v222, 16
        %v290 = vpop.permute.xlu0 %289
        %291 = vrot.lane.b32.xlu0 %v223, 16
        %v292 = vpop.permute.xlu0 %291
        %vm293 = vcmp.lt.s32.totalorder %v237, 16
        %v294 = vsel %vm293, %v290, %v292
        %v295 = vsel %vm293, %v288, %v290
        %v296 = vsel %vm293, %v286, %v288
        %v297 = vsel %vm293, %v292, %v286
        %v302 = vrot.slane %v296, 7
        %v303 = vrot.slane %v295, 6
        %v304 = vrot.slane %v294, 5
        %v305 = vsel %vm202, %v297, %v302
        %v306 = vsel %vm251, %v303, %v304
        %v307 = vsel %vm253, %v305, %v306
        %s309 = scalar_lea.vmem [#allocation4], 2
        %310 = vst.msk [vmem:[%s309] ss:$8 sm:$0xf] %vm213, %v307
        %311 = vst.msk [vmem:[%s309] ss:$8 sm:$0x0] %vm213, %v307
        %312 = vrot.lane.b32.xlu0 %v220, 112
        %v313 = vpop.permute.xlu0 %312
        %314 = vrot.lane.b32.xlu0 %v221, 112
        %v315 = vpop.permute.xlu0 %314
        %316 = vrot.lane.b32.xlu0 %v222, 112
        %v317 = vpop.permute.xlu0 %316
        %318 = vrot.lane.b32.xlu0 %v223, 112
        %v319 = vpop.permute.xlu0 %318
        %vm320 = vcmp.lt.s32.totalorder %v237, 112
        %v321 = vsel %vm320, %v317, %v319
        %v322 = vsel %vm320, %v315, %v317
        %v323 = vsel %vm320, %v313, %v315
        %v324 = vsel %vm320, %v319, %v313
        %v329 = vrot.slane %v322, 7
        %v330 = vrot.slane %v321, 6
        %v331 = vrot.slane %v324, 5
        %v332 = vsel %vm202, %v323, %v329
        %v333 = vsel %vm251, %v330, %v331
        %v334 = vsel %vm253, %v332, %v333
        %s336 = scalar_lea.vmem [#allocation4], 4
        %337 = vst.msk [vmem:[%s336] ss:$8 sm:$0xf] %vm213, %v334
        %338 = vst.msk [vmem:[%s336] ss:$8 sm:$0x0] %vm213, %v334
        %339 = vrot.lane.b32.xlu0 %v220, 96
        %v340 = vpop.permute.xlu0 %339
        %341 = vrot.lane.b32.xlu0 %v221, 96
        %v342 = vpop.permute.xlu0 %341
        %343 = vrot.lane.b32.xlu0 %v222, 96
        %v344 = vpop.permute.xlu0 %343
        %345 = vrot.lane.b32.xlu0 %v223, 96
        %v346 = vpop.permute.xlu0 %345
        %vm347 = vcmp.lt.s32.totalorder %v237, 96
        %v348 = vsel %vm347, %v344, %v346
        %v349 = vsel %vm347, %v342, %v344
        %v350 = vsel %vm347, %v340, %v342
        %v351 = vsel %vm347, %v346, %v340
        %v356 = vrot.slane %v349, 7
        %v357 = vrot.slane %v348, 6
        %v358 = vrot.slane %v351, 5
        %v359 = vsel %vm202, %v350, %v356
        %v360 = vsel %vm251, %v357, %v358
        %v361 = vsel %vm253, %v359, %v360
        %s363 = scalar_lea.vmem [#allocation4], 5
        %364 = vst.msk [vmem:[%s363] ss:$8 sm:$0xf] %vm213, %v361
        %365 = vst.msk [vmem:[%s363] ss:$8 sm:$0x0] %vm213, %v361
        %366 = vrot.lane.b32.xlu0 %v220, 80
        %v367 = vpop.permute.xlu0 %366
        %368 = vrot.lane.b32.xlu0 %v221, 80
        %v369 = vpop.permute.xlu0 %368
        %370 = vrot.lane.b32.xlu0 %v222, 80
        %v371 = vpop.permute.xlu0 %370
        %372 = vrot.lane.b32.xlu0 %v223, 80
        %v373 = vpop.permute.xlu0 %372
        %vm374 = vcmp.lt.s32.totalorder %v237, 80
        %v375 = vsel %vm374, %v371, %v373
        %v376 = vsel %vm374, %v369, %v371
        %v377 = vsel %vm374, %v367, %v369
        %v378 = vsel %vm374, %v373, %v367
        %v383 = vrot.slane %v376, 7
        %v384 = vrot.slane %v375, 6
        %v385 = vrot.slane %v378, 5
        %v386 = vsel %vm202, %v377, %v383
        %v387 = vsel %vm251, %v384, %v385
        %v388 = vsel %vm253, %v386, %v387
        %s390 = scalar_lea.vmem [#allocation4], 6
        %391 = vst.msk [vmem:[%s390] ss:$8 sm:$0xf] %vm213, %v388
        %392 = vst.msk [vmem:[%s390] ss:$8 sm:$0x0] %vm213, %v388
        %393 = vst [vmem:[#allocation4 + $0x23] sm:$0x1] 0.0
        %394 = vst [vmem:[#allocation4 + $0x3b] sm:$0x1] 0.0
        %v397 = vrot.slane %v196, 7
        %v398 = vsel %vm202, %v195, %v397
        %s400 = scalar_lea.vmem [#allocation4], 43
        %401 = vst.msk [vmem:[%s400] ss:$8 sm:$0x3] %vm208, %v398
        %402 = vst.msk [vmem:[%s400] ss:$8 sm:$0x0] %vm208, %v398
        %s403 = scalar_lea.vmem [#allocation4], 39
        %404 = vst.msk [vmem:[%s403] ss:$8 sm:$0xf] %vm213, 0.0
        %405 = vst.msk [vmem:[%s403] ss:$8 sm:$0x0] %vm213, 0.0
        %s406 = scalar_lea.vmem [#allocation4], 35
        %v407 = vld [vmem:[%s406] ss:$8 sm:$0xf]
        %v409 = vperm.slane %v407, 0
        %v410 = vperm.slane %v407, 1
        %v411 = vperm.slane %v407, 2
        %v412 = vperm.slane %v407, 3
        %417 = vrot.lane.b32.xlu0 %v409, 48
        %v418 = vpop.permute.xlu0 %417
        %419 = vrot.lane.b32.xlu0 %v410, 48
        %v420 = vpop.permute.xlu0 %419
        %421 = vrot.lane.b32.xlu0 %v411, 48
        %v422 = vpop.permute.xlu0 %421
        %423 = vrot.lane.b32.xlu0 %v412, 48
        %v424 = vpop.permute.xlu0 %423
        %v425 = vsel %vm238, %v422, %v424
        %v426 = vsel %vm238, %v420, %v422
        %v427 = vsel %vm238, %v418, %v420
        %v428 = vsel %vm238, %v424, %v418
        %v433 = vrot.slane %v427, 7
        %v434 = vrot.slane %v426, 6
        %v435 = vrot.slane %v425, 5
        %v436 = vsel %vm202, %v428, %v433
        %v437 = vsel %vm251, %v434, %v435
        %v438 = vsel %vm253, %v436, %v437
        %s440 = scalar_lea.vmem [#allocation4], 32
        %441 = vst.msk [vmem:[%s440] ss:$8 sm:$0xf] %vm213, %v438
        %442 = vst.msk [vmem:[%s440] ss:$8 sm:$0x0] %vm213, %v438
        %443 = vrot.lane.b32.xlu0 %v409, 32
        %v444 = vpop.permute.xlu0 %443
        %445 = vrot.lane.b32.xlu0 %v410, 32
        %v446 = vpop.permute.xlu0 %445
        %447 = vrot.lane.b32.xlu0 %v411, 32
        %v448 = vpop.permute.xlu0 %447
        %449 = vrot.lane.b32.xlu0 %v412, 32
        %v450 = vpop.permute.xlu0 %449
        %v451 = vsel %vm266, %v448, %v450
        %v452 = vsel %vm266, %v446, %v448
        %v453 = vsel %vm266, %v444, %v446
        %v454 = vsel %vm266, %v450, %v444
        %v459 = vrot.slane %v453, 7
        %v460 = vrot.slane %v452, 6
        %v461 = vrot.slane %v451, 5
        %v462 = vsel %vm202, %v454, %v459
        %v463 = vsel %vm251, %v460, %v461
        %v464 = vsel %vm253, %v462, %v463
        %s466 = scalar_lea.vmem [#allocation4], 33
        %467 = vst.msk [vmem:[%s466] ss:$8 sm:$0xf] %vm213, %v464
        %468 = vst.msk [vmem:[%s466] ss:$8 sm:$0x0] %vm213, %v464
        %469 = vrot.lane.b32.xlu0 %v409, 16
        %v470 = vpop.permute.xlu0 %469
        %471 = vrot.lane.b32.xlu0 %v410, 16
        %v472 = vpop.permute.xlu0 %471
        %473 = vrot.lane.b32.xlu0 %v411, 16
        %v474 = vpop.permute.xlu0 %473
        %475 = vrot.lane.b32.xlu0 %v412, 16
        %v476 = vpop.permute.xlu0 %475
        %v477 = vsel %vm293, %v474, %v476
        %v478 = vsel %vm293, %v472, %v474
        %v479 = vsel %vm293, %v470, %v472
        %v480 = vsel %vm293, %v476, %v470
        %v485 = vrot.slane %v479, 7
        %v486 = vrot.slane %v478, 6
        %v487 = vrot.slane %v477, 5
        %v488 = vsel %vm202, %v480, %v485
        %v489 = vsel %vm251, %v486, %v487
        %v490 = vsel %vm253, %v488, %v489
        %s492 = scalar_lea.vmem [#allocation4], 34
        %493 = vst.msk [vmem:[%s492] ss:$8 sm:$0xf] %vm213, %v490
        %494 = vst.msk [vmem:[%s492] ss:$8 sm:$0x0] %vm213, %v490
        %495 = vrot.lane.b32.xlu0 %v409, 112
        %v496 = vpop.permute.xlu0 %495
        %497 = vrot.lane.b32.xlu0 %v410, 112
        %v498 = vpop.permute.xlu0 %497
        %499 = vrot.lane.b32.xlu0 %v411, 112
        %v500 = vpop.permute.xlu0 %499
        %501 = vrot.lane.b32.xlu0 %v412, 112
        %v502 = vpop.permute.xlu0 %501
        %v503 = vsel %vm320, %v500, %v502
        %v504 = vsel %vm320, %v498, %v500
        %v505 = vsel %vm320, %v496, %v498
        %v506 = vsel %vm320, %v502, %v496
        %v511 = vrot.slane %v504, 7
        %v512 = vrot.slane %v503, 6
        %v513 = vrot.slane %v506, 5
        %v514 = vsel %vm202, %v505, %v511
        %v515 = vsel %vm251, %v512, %v513
        %v516 = vsel %vm253, %v514, %v515
        %s518 = scalar_lea.vmem [#allocation4], 36
        %519 = vst.msk [vmem:[%s518] ss:$8 sm:$0xf] %vm213, %v516
        %520 = vst.msk [vmem:[%s518] ss:$8 sm:$0x0] %vm213, %v516
        %521 = vrot.lane.b32.xlu0 %v409, 96
        %v522 = vpop.permute.xlu0 %521
        %523 = vrot.lane.b32.xlu0 %v410, 96
        %v524 = vpop.permute.xlu0 %523
        %525 = vrot.lane.b32.xlu0 %v411, 96
        %v526 = vpop.permute.xlu0 %525
        %527 = vrot.lane.b32.xlu0 %v412, 96
        %v528 = vpop.permute.xlu0 %527
        %v529 = vsel %vm347, %v526, %v528
        %v530 = vsel %vm347, %v524, %v526
        %v531 = vsel %vm347, %v522, %v524
        %v532 = vsel %vm347, %v528, %v522
        %v537 = vrot.slane %v530, 7
        %v538 = vrot.slane %v529, 6
        %v539 = vrot.slane %v532, 5
        %v540 = vsel %vm202, %v531, %v537
        %v541 = vsel %vm251, %v538, %v539
        %v542 = vsel %vm253, %v540, %v541
        %s544 = scalar_lea.vmem [#allocation4], 37
        %545 = vst.msk [vmem:[%s544] ss:$8 sm:$0xf] %vm213, %v542
        %546 = vst.msk [vmem:[%s544] ss:$8 sm:$0x0] %vm213, %v542
        %547 = vrot.lane.b32.xlu0 %v409, 80
        %v548 = vpop.permute.xlu0 %547
        %549 = vrot.lane.b32.xlu0 %v410, 80
        %v550 = vpop.permute.xlu0 %549
        %551 = vrot.lane.b32.xlu0 %v411, 80
        %v552 = vpop.permute.xlu0 %551
        %553 = vrot.lane.b32.xlu0 %v412, 80
        %v554 = vpop.permute.xlu0 %553
        %v555 = vsel %vm374, %v552, %v554
        %v556 = vsel %vm374, %v550, %v552
        %v557 = vsel %vm374, %v548, %v550
        %v558 = vsel %vm374, %v554, %v548
        %v563 = vrot.slane %v556, 7
        %v564 = vrot.slane %v555, 6
        %v565 = vrot.slane %v558, 5
        %v566 = vsel %vm202, %v557, %v563
        %v567 = vsel %vm251, %v564, %v565
        %v568 = vsel %vm253, %v566, %v567
        %s570 = scalar_lea.vmem [#allocation4], 38
        %571 = vst.msk [vmem:[%s570] ss:$8 sm:$0xf] %vm213, %v568
        %572 = vst.msk [vmem:[%s570] ss:$8 sm:$0x0] %vm213, %v568
        %v573 = vld [vmem:[#allocation4] sm:$0xff]
        %v574 = vld [vmem:[#allocation4 + $0x8] sm:$0xff]
        %v575 = vld [vmem:[#allocation4 + $0x10] sm:$0xff]
        %v576 = vld [vmem:[#allocation4 + $0x18] sm:$0xff]
        %v577 = vld [vmem:[#allocation4 + $0x20] sm:$0xff]
        %v578 = vld [vmem:[#allocation4 + $0x28] sm:$0xff]
        %v579 = vld [vmem:[#allocation4 + $0x30] sm:$0xff]
        %v580 = vld [vmem:[#allocation4 + $0x38] sm:$0xff]
        %581 = vrot.lane.b32.xlu0 %v573, 3
        %v582 = vpop.permute.xlu0 %581
        %583 = vrot.lane.b32.xlu0 %v574, 3
        %v584 = vpop.permute.xlu0 %583
        %585 = vrot.lane.b32.xlu0 %v575, 3
        %v586 = vpop.permute.xlu0 %585
        %vm587 = vcmp.lt.s32.totalorder %v237, 3
        %v588 = vsel %vm587, %v584, %v586
        %v589 = vsel %vm587, %v582, %v584
        %590 = vrot.lane.b32.xlu0 %v577, 3
        %v591 = vpop.permute.xlu0 %590
        %592 = vrot.lane.b32.xlu0 %v578, 3
        %v593 = vpop.permute.xlu0 %592
        %594 = vrot.lane.b32.xlu0 %v579, 3
        %v595 = vpop.permute.xlu0 %594
        %v596 = vsel %vm587, %v593, %v595
        %v597 = vsel %vm587, %v591, %v593
        %v598 = vld [vmem:[#allocation10] sm:$0xff]
        %600 = vset.pattern.permute.xlu0 0
        %601 = vperm.xlu0 %600, %v598
        %v602 = vpop.permute.xlu0 %601
        %v604 = vmul.f32 %v589, %v602
        %v605 = vmul.f32 %v588, %v602
        %606 = vset.pattern.permute.xlu0 7
        %607 = vperm.xlu0 %606, %v598
        %v608 = vpop.permute.xlu0 %607
        %v610 = vmul.f32 %v597, %v608
        %v611 = vmul.f32 %v596, %v608
        %v612 = vadd.f32 %v604, %v610
        %v613 = vadd.f32 %v605, %v611
        %v614 = vld [vmem:[#allocation11] ss:$8 sm:$0x3]
        %v616 = vperm.slane %v614, 0
        %v617 = vperm.slane %v614, 1
        %v620 = vmul.f32 %v616, %v612
        %v621 = vmul.f32 %v617, %v613
        %v622 = vadd.f32 %v620, 0.0
        %v623 = vadd.f32 %v621, 0.0
        %624 = vrot.lane.b32.xlu0 %v573, 2
        %v625 = vpop.permute.xlu0 %624
        %626 = vrot.lane.b32.xlu0 %v574, 2
        %v627 = vpop.permute.xlu0 %626
        %628 = vrot.lane.b32.xlu0 %v575, 2
        %v629 = vpop.permute.xlu0 %628
        %vm630 = vcmp.lt.s32.totalorder %v237, 2
        %v631 = vsel %vm630, %v627, %v629
        %v632 = vsel %vm630, %v625, %v627
        %633 = vrot.lane.b32.xlu0 %v577, 2
        %v634 = vpop.permute.xlu0 %633
        %635 = vrot.lane.b32.xlu0 %v578, 2
        %v636 = vpop.permute.xlu0 %635
        %637 = vrot.lane.b32.xlu0 %v579, 2
        %v638 = vpop.permute.xlu0 %637
        %v639 = vsel %vm630, %v636, %v638
        %v640 = vsel %vm630, %v634, %v636
        %641 = vset.pattern.permute.xlu0 1
        %642 = vperm.xlu0 %641, %v598
        %v643 = vpop.permute.xlu0 %642
        %v645 = vmul.f32 %v632, %v643
        %v646 = vmul.f32 %v631, %v643
        %647 = vset.pattern.permute.xlu0 8
        %648 = vperm.xlu0 %647, %v598
        %v649 = vpop.permute.xlu0 %648
        %v651 = vmul.f32 %v640, %v649
        %v652 = vmul.f32 %v639, %v649
        %v653 = vadd.f32 %v645, %v651
        %v654 = vadd.f32 %v646, %v652
        %s655 = scalar_lea.vmem [#allocation11], 1
        %v656 = vld [vmem:[%s655] ss:$8 sm:$0x3]
        %v658 = vperm.slane %v656, 0
        %v659 = vperm.slane %v656, 1
        %v662 = vmul.f32 %v658, %v653
        %v663 = vmul.f32 %v659, %v654
        %v664 = vadd.f32 %v622, %v662
        %v665 = vadd.f32 %v623, %v663
        %666 = vrot.lane.b32.xlu0 %v573, 1
        %v667 = vpop.permute.xlu0 %666
        %668 = vrot.lane.b32.xlu0 %v574, 1
        %v669 = vpop.permute.xlu0 %668
        %670 = vrot.lane.b32.xlu0 %v575, 1
        %v671 = vpop.permute.xlu0 %670
        %vm672 = vcmp.lt.s32.totalorder %v237, 1
        %v673 = vsel %vm672, %v669, %v671
        %v674 = vsel %vm672, %v667, %v669
        %675 = vrot.lane.b32.xlu0 %v577, 1
        %v676 = vpop.permute.xlu0 %675
        %677 = vrot.lane.b32.xlu0 %v578, 1
        %v678 = vpop.permute.xlu0 %677
        %679 = vrot.lane.b32.xlu0 %v579, 1
        %v680 = vpop.permute.xlu0 %679
        %v681 = vsel %vm672, %v678, %v680
        %v682 = vsel %vm672, %v676, %v678
        %683 = vset.pattern.permute.xlu0 2
        %684 = vperm.xlu0 %683, %v598
        %v685 = vpop.permute.xlu0 %684
        %v687 = vmul.f32 %v674, %v685
        %v688 = vmul.f32 %v673, %v685
        %689 = vset.pattern.permute.xlu0 9
        %690 = vperm.xlu0 %689, %v598
        %v691 = vpop.permute.xlu0 %690
        %v693 = vmul.f32 %v682, %v691
        %v694 = vmul.f32 %v681, %v691
        %v695 = vadd.f32 %v687, %v693
        %v696 = vadd.f32 %v688, %v694
        %s697 = scalar_lea.vmem [#allocation11], 2
        %v698 = vld [vmem:[%s697] ss:$8 sm:$0x3]
        %v700 = vperm.slane %v698, 0
        %v701 = vperm.slane %v698, 1
        %v704 = vmul.f32 %v700, %v695
        %v705 = vmul.f32 %v701, %v696
        %v706 = vadd.f32 %v664, %v704
        %v707 = vadd.f32 %v665, %v705
        %708 = vset.pattern.permute.xlu0 3
        %709 = vperm.xlu0 %708, %v598
        %v710 = vpop.permute.xlu0 %709
        %v712 = vmul.f32 %v574, %v710
        %v713 = vmul.f32 %v575, %v710
        %714 = vset.pattern.permute.xlu0 10
        %715 = vperm.xlu0 %714, %v598
        %v716 = vpop.permute.xlu0 %715
        %v718 = vmul.f32 %v578, %v716
        %v719 = vmul.f32 %v579, %v716
        %v720 = vadd.f32 %v712, %v718
        %v721 = vadd.f32 %v713, %v719
        %s722 = scalar_lea.vmem [#allocation11], 3
        %v723 = vld [vmem:[%s722] ss:$8 sm:$0x3]
        %v725 = vperm.slane %v723, 0
        %v726 = vperm.slane %v723, 1
        %v729 = vmul.f32 %v725, %v720
        %v730 = vmul.f32 %v726, %v721
        %v731 = vadd.f32 %v706, %v729
        %v732 = vadd.f32 %v707, %v730
        %733 = vrot.lane.b32.xlu0 %v574, 127
        %v734 = vpop.permute.xlu0 %733
        %735 = vrot.lane.b32.xlu0 %v575, 127
        %v736 = vpop.permute.xlu0 %735
        %737 = vrot.lane.b32.xlu0 %v576, 127
        %v738 = vpop.permute.xlu0 %737
        %vm739 = vcmp.lt.s32.totalorder %v237, 127
        %v740 = vsel %vm739, %v736, %v738
        %v741 = vsel %vm739, %v734, %v736
        %742 = vrot.lane.b32.xlu0 %v578, 127
        %v743 = vpop.permute.xlu0 %742
        %744 = vrot.lane.b32.xlu0 %v579, 127
        %v745 = vpop.permute.xlu0 %744
        %746 = vrot.lane.b32.xlu0 %v580, 127
        %v747 = vpop.permute.xlu0 %746
        %v748 = vsel %vm739, %v745, %v747
        %v749 = vsel %vm739, %v743, %v745
        %750 = vset.pattern.permute.xlu0 4
        %751 = vperm.xlu0 %750, %v598
        %v752 = vpop.permute.xlu0 %751
        %v754 = vmul.f32 %v741, %v752
        %v755 = vmul.f32 %v740, %v752
        %756 = vset.pattern.permute.xlu0 11
        %757 = vperm.xlu0 %756, %v598
        %v758 = vpop.permute.xlu0 %757
        %v760 = vmul.f32 %v749, %v758
        %v761 = vmul.f32 %v748, %v758
        %v762 = vadd.f32 %v754, %v760
        %v763 = vadd.f32 %v755, %v761
        %s764 = scalar_lea.vmem [#allocation11], 4
        %v765 = vld [vmem:[%s764] ss:$8 sm:$0x3]
        %v767 = vperm.slane %v765, 0
        %v768 = vperm.slane %v765, 1
        %v771 = vmul.f32 %v767, %v762
        %v772 = vmul.f32 %v768, %v763
        %v773 = vadd.f32 %v731, %v771
        %v774 = vadd.f32 %v732, %v772
        %775 = vrot.lane.b32.xlu0 %v574, 126
        %v776 = vpop.permute.xlu0 %775
        %777 = vrot.lane.b32.xlu0 %v575, 126
        %v778 = vpop.permute.xlu0 %777
        %779 = vrot.lane.b32.xlu0 %v576, 126
        %v780 = vpop.permute.xlu0 %779
        %vm781 = vcmp.lt.s32.totalorder %v237, 126
        %v782 = vsel %vm781, %v778, %v780
        %v783 = vsel %vm781, %v776, %v778
        %784 = vrot.lane.b32.xlu0 %v578, 126
        %v785 = vpop.permute.xlu0 %784
        %786 = vrot.lane.b32.xlu0 %v579, 126
        %v787 = vpop.permute.xlu0 %786
        %788 = vrot.lane.b32.xlu0 %v580, 126
        %v789 = vpop.permute.xlu0 %788
        %v790 = vsel %vm781, %v787, %v789
        %v791 = vsel %vm781, %v785, %v787
        %792 = vset.pattern.permute.xlu0 5
        %793 = vperm.xlu0 %792, %v598
        %v794 = vpop.permute.xlu0 %793
        %v796 = vmul.f32 %v783, %v794
        %v797 = vmul.f32 %v782, %v794
        %798 = vset.pattern.permute.xlu0 12
        %799 = vperm.xlu0 %798, %v598
        %v800 = vpop.permute.xlu0 %799
        %v802 = vmul.f32 %v791, %v800
        %v803 = vmul.f32 %v790, %v800
        %v804 = vadd.f32 %v796, %v802
        %v805 = vadd.f32 %v797, %v803
        %s806 = scalar_lea.vmem [#allocation11], 5
        %v807 = vld [vmem:[%s806] ss:$8 sm:$0x3]
        %v809 = vperm.slane %v807, 0
        %v810 = vperm.slane %v807, 1
        %v813 = vmul.f32 %v809, %v804
        %v814 = vmul.f32 %v810, %v805
        %v815 = vadd.f32 %v773, %v813
        %v816 = vadd.f32 %v774, %v814
        %817 = vrot.lane.b32.xlu0 %v574, 125
        %v818 = vpop.permute.xlu0 %817
        %819 = vrot.lane.b32.xlu0 %v575, 125
        %v820 = vpop.permute.xlu0 %819
        %821 = vrot.lane.b32.xlu0 %v576, 125
        %v822 = vpop.permute.xlu0 %821
        %vm823 = vcmp.lt.s32.totalorder %v237, 125
        %v824 = vsel %vm823, %v820, %v822
        %v825 = vsel %vm823, %v818, %v820
        %826 = vrot.lane.b32.xlu0 %v578, 125
        %v827 = vpop.permute.xlu0 %826
        %828 = vrot.lane.b32.xlu0 %v579, 125
        %v829 = vpop.permute.xlu0 %828
        %830 = vrot.lane.b32.xlu0 %v580, 125
        %v831 = vpop.permute.xlu0 %830
        %v832 = vsel %vm823, %v829, %v831
        %v833 = vsel %vm823, %v827, %v829
        %834 = vset.pattern.permute.xlu0 6
        %835 = vperm.xlu0 %834, %v598
        %v836 = vpop.permute.xlu0 %835
        %v838 = vmul.f32 %v825, %v836
        %v839 = vmul.f32 %v824, %v836
        %840 = vset.pattern.permute.xlu0 13
        %841 = vperm.xlu0 %840, %v598
        %v842 = vpop.permute.xlu0 %841
        %v844 = vmul.f32 %v833, %v842
        %v845 = vmul.f32 %v832, %v842
        %v846 = vadd.f32 %v838, %v844
        %v847 = vadd.f32 %v839, %v845
        %s848 = scalar_lea.vmem [#allocation11], 6
        %v849 = vld [vmem:[%s848] ss:$8 sm:$0x3]
        %v851 = vperm.slane %v849, 0
        %v852 = vperm.slane %v849, 1
        %v855 = vmul.f32 %v851, %v846
        %v856 = vmul.f32 %v852, %v847
        %v857 = vadd.f32 %v815, %v855
        %v858 = vadd.f32 %v816, %v856
        %v859 = vrot.slane %v857, 4
        %v860 = vadd.f32 %v857, %v859
        %v861 = vrot.slane %v860, 2
        %v862 = vadd.f32 %v860, %v861
        %v863 = vrot.slane %v862, 1
        %v864 = vadd.f32 %v862, %v863
        %v865 = vrot.slane %v858, 4
        %v866 = vadd.f32 %v858, %v865
        %v867 = vrot.slane %v866, 2
        %v868 = vadd.f32 %v866, %v867
        %v869 = vrot.slane %v868, 1
        %v870 = vadd.f32 %v868, %v869
        %s871 = sld [smem:[#allocation7]]
        %v872 = vstv %s871
        %v873 = vmul.f32 %v864, %v872
        %v874 = vmul.f32 %v870, %v872
        %s875 = sld [smem:[#allocation7 + $0x1]]
        %v876 = vstv %s875
        %v877 = vadd.f32 %v873, %v876
        %v878 = vadd.f32 %v874, %v876
        %v879 = vxor.u32 %v877, 2147483648
        %v880 = vxor.u32 %v878, 2147483648
        %v881 = vmul.f32 %v879, 1.442695
        %v882 = vpow.pop %v881
        %v883 = vmul.f32 %v880, 1.442695
        %v884 = vpow.pop %v883
        %v885 = vadd.f32 %v882, 1.0
        %v886 = vadd.f32 %v884, 1.0
        %v887 = vrcp.pop %v885
        %v888 = vmul.f32 %v885, %v887
        %v889 = vsub.f32 1.0, %v888
        %v890 = vmul.f32 %v887, %v889
        %v891 = vadd.f32 %v887, %v890
        %vm892 = vweird.f32 %v885
        %vm893 = vweird.f32 %v887
        %vm894 = vmor %vm892, %vm893
        %v895 = vsel %vm894, %v887, %v891
        %v896 = vand.u32 2147483647, %v885
        %vm897 = vcmp.eq.f32.partialorder %v896, 8.507059e+37
        %v898 = vand.u32 %v885, 2147483648
        %v899 = vor.u32 1.1754944e-38, %v898
        %v900 = vsel %vm897, %v899, %v895
        %v901 = vmul.f32 1.0, %v900
        %v902 = vrcp.pop %v886
        %v903 = vmul.f32 %v886, %v902
        %v904 = vsub.f32 1.0, %v903
        %v905 = vmul.f32 %v902, %v904
        %v906 = vadd.f32 %v902, %v905
        %vm907 = vweird.f32 %v886
        %vm908 = vweird.f32 %v902
        %vm909 = vmor %vm907, %vm908
        %v910 = vsel %vm909, %v902, %v906
        %v911 = vand.u32 2147483647, %v886
        %vm912 = vcmp.eq.f32.partialorder %v911, 8.507059e+37
        %v913 = vand.u32 %v886, 2147483648
        %v914 = vor.u32 1.1754944e-38, %v913
        %v915 = vsel %vm912, %v914, %v910
        %v916 = vmul.f32 1.0, %v915
        %v917 = vld [vmem:[#allocation2] sm:$0xff]
        %v920 = vrot.slane %v916, 4
        %v921 = vsel %vm160, %v901, %v920
        %v923 = vmul.f32 %v917, %v921
        %924 = vst [vmem:[#allocation3] sm:$0xff] %v923
        %s925 = smul.addr %s132, 4
        %s926 = scalar_lea.hbm %s4, %s925
        // Predicated region
        $region49: #{tpu_custom_call.1} parent=31 // pred_check
          _
        $region50: #{tpu_custom_call.1} parent=31 // pred_check_branch
          %928 = sbr.rel target = $region52
        $region51: #{tpu_custom_call.1} parent=31 // pred_region
          %929 = sst [smem:[#allocation15]] [#allocation18]
          %930 = sst [smem:[#allocation16]] [#allocation17]
        $region52: #{tpu_custom_call.1} parent=31 // pred_fallthru
          _
        %932 = shalt.err (0)
        %s934 = sshll.u32 [#allocation3], 4
        %s935 = int_to_ptr.vmem [resolvable:$true] %s934
        %s936 = sshll.u32 %s926, 4
        %s937 = int_to_ptr.hbm [resolvable:$true] %s936
        %939 = dma.vmem_to_hbm [thread:$0]  %s935, 128, %s937, [#allocation6]
        %s940 = sshll.u32 %s149, 4
        %941 = dma.done [#allocation6], %s940
      $region32: #{tpu_custom_call.1} parent=5 // pred_fallthru
        _
    $region6: #{tpu_custom_call.1} parent=1 // loop_footer
      %s17 = sadd.s32 1, %s13
    $region7: #{tpu_custom_call.1} parent=1 // loop_footer_branch
      %12 = sbr.rel target = $region3
    $region8: #{tpu_custom_call.1} parent=1 // loop_exit
      _
    %942 = vsyncpa [#allocation8], 1
    %s943 = scalar_lea.sflag [#allocation8], 1
    %944 = vsyncpa %s943, 1
    %945 = vsyncpa [#allocation12], 1
    %946 = vsyncpa [#allocation9], 1
    %s947 = scalar_lea.sflag [#allocation9], 1
    %948 = vsyncpa %s947, 1
  %949 = vsyncmov [#allocation5]
  %s950 = vpop.sfrf %949
  %p951 = scmp.eq.s32.totalorder %s950, 0
  %p952 = pneg %p951
  %954 = shalt.err (%p952)
  %s955 = scalar_lea.sflag [#allocation5], 1
  %956 = vsyncmov %s955
  %s957 = vpop.sfrf %956
  %p958 = scmp.eq.s32.totalorder %s957, 0
  %p959 = pneg %p958
  %961 = shalt.err (%p959)
  %962 = vsyncmov [#allocation6]
  %s963 = vpop.sfrf %962
  %p964 = scmp.eq.s32.totalorder %s963, 0
  %p965 = pneg %p964
  %967 = shalt.err (%p965)
  %s968 = scalar_lea.sflag [#allocation6], 1
  %969 = vsyncmov %s968
  %s970 = vpop.sfrf %969
  %p971 = scmp.eq.s32.totalorder %s970, 0
  %p972 = pneg %p971
  %974 = shalt.err (%p972)

</llo_original>
